<compile_context>
chip_gen: v7x
topology: tpu7x:2x2x1
jax: 0.10.0
libtpu: 0.0.40
codegen_flags: <defaults>
</compile_context>

<pallas_src>
import math
import functools

import numpy as np
import jax
import jax.numpy as jnp
from jax.experimental import pallas as pl
from jax.experimental.pallas import tpu as pltpu

_INV_SQRT2 = 1.0 / math.sqrt(2.0)


def _round_up(v, m):
    return ((v + m - 1) // m) * m


# --------------------------------------------------------------------------- #
# Kernel
# --------------------------------------------------------------------------- #
def residual_block_kernel(
    x_ref,       # (tT, C)      current time tile of x
    lhalo_ref,   # (hp, C)      y-space halo; valid rows [0, d) = y[t0-d : t0]
    rhalo_ref,   # (hp, C)      y-space halo; valid rows [hp-d, hp) = y[t1 : t1+d]
    cond_ref,    # (tT, E)      conditioner tile
    dproj_ref,   # (1, C)       precomputed diffusion projection (per batch elem)
    w_dc_ref,    # (H*3, C, N)  dilated-conv weights, tap-major per half (bf16)
    w_cp_ref,    # (H, E, N)    conditioner projection weights (bf16)
    b_in_ref,    # (H, 1, N)    conv + conditioner bias (f32)
    w_out_ref,   # (H, C, N)    output projection weights (bf16)
    b_out_ref,   # (H, 1, N)    output projection bias (f32)
    res_ref,     # (tT, C)      output: (x + residual) / sqrt(2)
    skip_ref,    # (tT, C)      output: skip
    *,
    dilation: int,
):
    f32 = jnp.float32
    bf16 = jnp.bfloat16
    d = dilation

    x = x_ref[...].astype(f32)                       # (tT, C)
    tT, C = x.shape
    hp = lhalo_ref.shape[0]

    # y = x + diffusion_projection (broadcast over time).
    y_c = x + dproj_ref[...].astype(f32)

    # ---- dilated-conv taps y[t-d] / y[t+d] ----------------------------------
    # Halo rows arrive already in y-space and already zeroed at the sequence
    # boundary (Conv1d zero padding), so no program_id masking is needed here.
    lh = lhalo_ref[...].astype(f32)                  # valid rows: [0, d)
    rh = rhalo_ref[...].astype(f32)                  # valid rows: [hp-d, hp)
    if hp < tT:
        zpad = jnp.zeros((tT - hp, C), f32)
        lh_full = jnp.concatenate([lh, zpad], axis=0)     # valid at rows [0, d)
        rh_full = jnp.concatenate([zpad, rh], axis=0)     # valid at rows [tT-d, tT)
    else:
        lh_full, rh_full = lh, rh

    if d == tT:
        y_m, y_p = lh_full, rh_full
    else:
        row = jax.lax.broadcasted_iota(jnp.int32, (tT, 1), 0)
        y_m = jnp.where(row < d, lh_full, pltpu.roll(y_c, d, axis=0))
        y_p = jnp.where(row >= tT - d, rh_full, pltpu.roll(y_c, tT - d, axis=0))

    y_m_b = y_m.astype(bf16)
    y_c_b = y_c.astype(bf16)
    y_p_b = y_p.astype(bf16)
    cond_b = cond_ref[...].astype(bf16)

    w_dc = w_dc_ref[...]
    w_cp = w_cp_ref[...]
    b_in = b_in_ref[...]
    w_out = w_out_ref[...]
    b_out = b_out_ref[...]
    H = w_cp.shape[0]          # 1 -> gate/filter fused along N, 2 -> split halves

    # ---- dilated conv + conditioner projection ------------------------------
    halves = []
    for hh in range(H):
        z = (jnp.dot(y_m_b, w_dc[3 * hh + 0], preferred_element_type=f32)
             + jnp.dot(y_c_b, w_dc[3 * hh + 1], preferred_element_type=f32)
             + jnp.dot(y_p_b, w_dc[3 * hh + 2], preferred_element_type=f32)
             + jnp.dot(cond_b, w_cp[hh], preferred_element_type=f32)
             + b_in[hh])
        halves.append(z)
    if H == 1:                                   # split at 128-aligned column: free
        gate, filt = halves[0][:, :C], halves[0][:, C:]
    else:
        gate, filt = halves

    # ---- gated activation (f32 EUP: portable to v5e) ------------------------
    h = (jax.nn.sigmoid(gate) * jnp.tanh(filt)).astype(bf16)     # (tT, C)

    # ---- output projection ---------------------------------------------------
    outs = [jnp.dot(h, w_out[hh], preferred_element_type=f32) + b_out[hh]
            for hh in range(H)]
    if H == 1:
        res_half, skip_half = outs[0][:, :C], outs[0][:, C:]
    else:
        res_half, skip_half = outs

    res_ref[...] = ((x + res_half) * _INV_SQRT2).astype(res_ref.dtype)
    skip_ref[...] = skip_half.astype(skip_ref.dtype)


# --------------------------------------------------------------------------- #
# Tiling / VMEM budget helpers
# --------------------------------------------------------------------------- #
def _vmem_budget_bytes():
    """~75% of physical per-core VMEM (≈48 MiB on v7x, ≈96 MiB on v5e/v6e)."""
    cap = 64 * 1024 * 1024
    try:
        cap = int(getattr(pltpu.get_tpu_info(), "vmem_capacity_bytes", cap))
    except Exception:
        pass
    return min(cap * 3 // 4, 100 * 1024 * 1024)


def _choose_time_tile(T, C, E, dilation, budget_bytes, hard_cap=4096):
    """Largest multiple-of-8 divisor of T whose pipelined working set fits the
    VMEM budget (resident weights + double-buffered tiles + kernel temps)."""
    # Resident weights/biases: dilated-conv + cond + out-proj (bf16) + biases.
    resident = 2 * (2 * C) * (4 * C + E) + 6 * (2 * C) * 4
    # Bytes per time row: double-buffered f32 x/cond/res/skip pipeline tiles plus
    # in-kernel f32/bf16 temporaries (y_m/y_c/y_p, gate/filt, h, outs, ...).
    per_row = 2 * 4 * (3 * C + E) + 40 * C + 6 * E
    avail = max(budget_bytes // 2 - resident, 8 * per_row)
    max_rows = int(max(8, min(hard_cap, avail // per_row)))
    if T <= max_rows:
        return T
    tt_max = max_rows - (max_rows % 8)
    for tt in range(tt_max, 7, -8):
        if T % tt == 0 and tt >= dilation:
            return tt
    # TODO(synk): ragged T (no suitable divisor) should use a cdiv grid with a
    # masked edge tile instead of silently falling back to one full-T tile.
    return T


# --------------------------------------------------------------------------- #
# Wrappers
# --------------------------------------------------------------------------- #
def residual_block_forward_ntc(x_t, cond_t, diffusion_step, params, dilation,
                               t_tile=None):
    """NTC-layout forward.  x_t: (B, T, C), cond_t: (B, T, E),
    diffusion_step: (B, C).  Returns (residual_out, skip), both (B, T, C)."""
    B, T, C = x_t.shape
    E = cond_t.shape[-1]
    d = dilation
    assert 1 <= d <= T, "dilation must be in [1, T]"

    f32 = jnp.float32
    bf16 = jnp.bfloat16

    budget = _vmem_budget_bytes()
    tT = t_tile if t_tile is not None else _choose_time_tile(T, C, E, d, budget)
    assert T % tT == 0, "time tile must divide T"
    nT = T // tT
    assert d <= tT, "dilation must fit within one time tile"
    hp = min(_round_up(d, 8), tT)        # halo rows (sublane-aligned when < tT)

    # ---- hoisted diffusion projection: one (B,C)@(C,C) matmul ---------------
    dproj = (diffusion_step.astype(f32) @ params["w_diff"].T.astype(f32)
             + params["b_diff"].astype(f32)).reshape(B, 1, C)

    # ---- tiny y-space halo tensors, gathered straight from x ----------------
    j = jnp.arange(hp)
    base = jnp.arange(nT) * tT
    idx_l = jnp.clip(base[:, None] - d + j[None, :], 0, T - 1)              # (nT, hp)
    idx_r = jnp.clip(base[:, None] + tT - (hp - d) + j[None, :], 0, T - 1)  # (nT, hp)
    dproj4 = dproj[:, None, :, :]                                           # (B,1,1,C)
    lhalo = jnp.take(x_t, idx_l, axis=1).astype(f32) + dproj4               # (B,nT,hp,C)
    rhalo = jnp.take(x_t, idx_r, axis=1).astype(f32) + dproj4
    lhalo = lhalo.at[:, 0].set(0.0)          # Conv1d zero padding at sequence start
    rhalo = rhalo.at[:, nT - 1].set(0.0)     # ... and at sequence end

    # ---- weight prep: (Cin, Cout) layouts; gate/filter (and res/skip) fused
    # along N only when C is 128-aligned, otherwise kept as two halves so no
    # mid-lane slicing happens inside the kernel. -----------------------------
    fuse_n = (C % 128 == 0)
    col_slices = [slice(0, 2 * C)] if fuse_n else [slice(0, C), slice(C, 2 * C)]
    H = len(col_slices)
    N = (2 * C) // H

    w_dc_t = jnp.transpose(params["w_dc"], (2, 1, 0))        # (3, Cin, 2C), tap-major
    w_cp_t = params["w_cp"][:, :, 0].T                        # (E, 2C)
    w_op_t = params["w_op"][:, :, 0].T                        # (C, 2C)
    b_in_full = params["b_dc"] + params["b_cp"]               # (2C,)

    w_dc = jnp.concatenate([w_dc_t[:, :, s] for s in col_slices],
                           axis=0).astype(bf16)                          # (H*3, C, N)
    w_cp = jnp.stack([w_cp_t[:, s] for s in col_slices], 0).astype(bf16)  # (H, E, N)
    w_out = jnp.stack([w_op_t[:, s] for s in col_slices], 0).astype(bf16)  # (H, C, N)
    b_in = jnp.stack([b_in_full[s] for s in col_slices],
                     0)[:, None, :].astype(f32)                          # (H, 1, N)
    b_out = jnp.stack([params["b_op"][s] for s in col_slices],
                      0)[:, None, :].astype(f32)                         # (H, 1, N)

    kernel = functools.partial(residual_block_kernel, dilation=d)
    out_spec = pl.BlockSpec((None, tT, C), lambda b, t: (b, t, 0))
    const3 = lambda b, t: (0, 0, 0)

    res_t, skip_t = pl.pallas_call(
        kernel,
        out_shape=(jax.ShapeDtypeStruct((B, T, C), x_t.dtype),
                   jax.ShapeDtypeStruct((B, T, C), x_t.dtype)),
        grid_spec=pltpu.PrefetchScalarGridSpec(
            num_scalar_prefetch=0,
            grid=(B, nT),
            in_specs=[
                pl.BlockSpec((None, tT, C), lambda b, t: (b, t, 0)),            # x
                pl.BlockSpec((None, None, hp, C), lambda b, t: (b, t, 0, 0)),   # lhalo
                pl.BlockSpec((None, None, hp, C), lambda b, t: (b, t, 0, 0)),   # rhalo
                pl.BlockSpec((None, tT, E), lambda b, t: (b, t, 0)),            # cond
                pl.BlockSpec((None, 1, C), lambda b, t: (b, 0, 0)),             # dproj
                # weights / biases: constant index maps -> resident in VMEM
                pl.BlockSpec((H * 3, C, N), const3),                            # w_dc
                pl.BlockSpec((H, E, N), const3),                                # w_cp
                pl.BlockSpec((H, 1, N), const3),                                # b_in
                pl.BlockSpec((H, C, N), const3),                                # w_out
                pl.BlockSpec((H, 1, N), const3),                                # b_out
            ],
            out_specs=(out_spec, out_spec),
        ),
        compiler_params=pltpu.CompilerParams(
            dimension_semantics=("parallel", "parallel"),
            vmem_limit_bytes=int(budget),
        ),
    )(x_t, lhalo, rhalo, cond_t, dproj, w_dc, w_cp, b_in, w_out, b_out)

    return res_t, skip_t


def residual_block_forward(x, conditioner, diffusion_step, params, dilation,
                           t_tile=None):
    """Matches the PyTorch module interface: x (B, C, T), conditioner (B, E, T),
    diffusion_step (B, C) -> ((x + residual)/sqrt(2), skip), both (B, C, T).

    The NCT<->NTC transposes are pure layout glue at the module boundary; a full
    network should stay in NTC and call residual_block_forward_ntc directly."""
    x_t = jnp.transpose(x, (0, 2, 1))
    cond_t = jnp.transpose(conditioner, (0, 2, 1))
    res_t, skip_t = residual_block_forward_ntc(x_t, cond_t, diffusion_step,
                                               params, dilation, t_tile)
    return jnp.transpose(res_t, (0, 2, 1)), jnp.transpose(skip_t, (0, 2, 1))


# --------------------------------------------------------------------------- #
# Pure-JAX reference (mirrors the PyTorch forward, NCT layout)
# --------------------------------------------------------------------------- #
def ref_forward(x, conditioner, diffusion_step, params, dilation):
    C = x.shape[1]
    dproj = diffusion_step @ params["w_diff"].T + params["b_diff"]     # (B, C)
    y = x + dproj[:, :, None]
    dn = ("NCH", "OIH", "NCH")
    conv = jax.lax.conv_general_dilated(
        y, params["w_dc"], window_strides=(1,),
        padding=[(dilation, dilation)], rhs_dilation=(dilation,),
        dimension_numbers=dn) + params["b_dc"][None, :, None]
    condp = jax.lax.conv_general_dilated(
        conditioner, params["w_cp"], (1,), [(0, 0)],
        dimension_numbers=dn) + params["b_cp"][None, :, None]
    z = conv + condp
    gate, filt = z[:, :C], z[:, C:]
    h = jax.nn.sigmoid(gate) * jnp.tanh(filt)
    out = jax.lax.conv_general_dilated(
        h, params["w_op"], (1,), [(0, 0)],
        dimension_numbers=dn) + params["b_op"][None, :, None]
    residual, skip = out[:, :C], out[:, C:]
    return (x + residual) / math.sqrt(2.0), skip


# --------------------------------------------------------------------------- #
# Self-test
# --------------------------------------------------------------------------- #
if __name__ == "__main__":
    B = 2
    C = 4          # residual_channels
    E = 8          # encoder_hidden
    T = 32         # sequence length
    dilation = 2
    C2 = 2 * C

    key = jax.random.PRNGKey(0)
    keys = jax.random.split(key, 11)

    # Deterministic synthetic parameters (shapes match the PyTorch module).
    params = {
        "w_diff": 0.3 * jax.random.normal(keys[0], (C, C), jnp.float32),
        "b_diff": 0.1 * jax.random.normal(keys[1], (C,), jnp.float32),
        "w_dc":   0.3 * jax.random.normal(keys[2], (C2, C, 3), jnp.float32),
        "b_dc":   0.1 * jax.random.normal(keys[3], (C2,), jnp.float32),
        "w_cp":   0.3 * jax.random.normal(keys[4], (C2, E, 1), jnp.float32),
        "b_cp":   0.1 * jax.random.normal(keys[5], (C2,), jnp.float32),
        "w_op":   0.3 * jax.random.normal(keys[6], (C2, C, 1), jnp.float32),
        "b_op":   0.1 * jax.random.normal(keys[7], (C2,), jnp.float32),
    }

    x = jax.random.normal(keys[8], (B, C, T), jnp.float32)
    conditioner = jax.random.normal(keys[9], (B, E, T), jnp.float32)
    diffusion_step = jax.random.normal(keys[10], (B, C), jnp.float32)

    res_want, skip_want = ref_forward(x, conditioner, diffusion_step,
                                      params, dilation)

    # Multi-tile path: t_tile=8 forces 4 time tiles, exercising cross-tile halos.
    res, skip = residual_block_forward(x, conditioner, diffusion_step,
                                       params, dilation, t_tile=8)
    jax.block_until_ready((res, skip))
    assert res.shape == (B, C, T) and skip.shape == (B, C, T)
    np.testing.assert_allclose(np.asarray(res), np.asarray(res_want),
                               rtol=2e-2, atol=2e-2)
    np.testing.assert_allclose(np.asarray(skip), np.asarray(skip_want),
                               rtol=2e-2, atol=2e-2)

    # Auto-tiled path (single tile here; exercises the padded-halo branch).
    res2, skip2 = residual_block_forward(x, conditioner, diffusion_step,
                                         params, dilation)
    jax.block_until_ready((res2, skip2))
    np.testing.assert_allclose(np.asarray(res2), np.asarray(res_want),
                               rtol=2e-2, atol=2e-2)
    np.testing.assert_allclose(np.asarray(skip2), np.asarray(skip_want),
                               rtol=2e-2, atol=2e-2)

    print("KERNEL_OK")
</pallas_src>

<mosaic_0001>
module attributes {stable_mosaic.version = 11 : i64} {
  func.func @residual_block_kernel(%arg0: i32, %arg1: i32, %arg2: memref<1x8x4xf32, #tpu.memory_space<vmem>>, %arg3: memref<1x1x8x4xf32, #tpu.memory_space<vmem>>, %arg4: memref<1x1x8x4xf32, #tpu.memory_space<vmem>>, %arg5: memref<1x8x8xf32, #tpu.memory_space<vmem>>, %arg6: memref<1x1x4xf32, #tpu.memory_space<vmem>>, %arg7: memref<6x4x4xbf16, #tpu.memory_space<vmem>>, %arg8: memref<2x8x4xbf16, #tpu.memory_space<vmem>>, %arg9: memref<2x1x4xf32, #tpu.memory_space<vmem>>, %arg10: memref<2x4x4xbf16, #tpu.memory_space<vmem>>, %arg11: memref<2x1x4xf32, #tpu.memory_space<vmem>>, %arg12: memref<1x8x4xf32, #tpu.memory_space<vmem>>, %arg13: memref<1x8x4xf32, #tpu.memory_space<vmem>>) attributes {dimension_semantics = [#tpu.dimension_semantics<parallel>, #tpu.dimension_semantics<parallel>], iteration_bounds = array<i64: 2, 4>, scalar_prefetch = 0 : i64, scratch_operands = 0 : i64, tpu.core_type = #tpu.core_type<tc>, window_params = [{transform_indices = @transform_0, window_bounds = array<i64: 1, 8, 4>}, {transform_indices = @transform_1, window_bounds = array<i64: 1, 1, 8, 4>}, {transform_indices = @transform_2, window_bounds = array<i64: 1, 1, 8, 4>}, {transform_indices = @transform_3, window_bounds = array<i64: 1, 8, 8>}, {transform_indices = @transform_4, window_bounds = array<i64: 1, 1, 4>}, {pipeline_mode = #tpu.pipeline_mode<synchronous>, transform_indices = @transform_5, window_bounds = array<i64: 6, 4, 4>}, {pipeline_mode = #tpu.pipeline_mode<synchronous>, transform_indices = @transform_6, window_bounds = array<i64: 2, 8, 4>}, {pipeline_mode = #tpu.pipeline_mode<synchronous>, transform_indices = @transform_7, window_bounds = array<i64: 2, 1, 4>}, {pipeline_mode = #tpu.pipeline_mode<synchronous>, transform_indices = @transform_8, window_bounds = array<i64: 2, 4, 4>}, {pipeline_mode = #tpu.pipeline_mode<synchronous>, transform_indices = @transform_9, window_bounds = array<i64: 2, 1, 4>}, {transform_indices = @transform_10, window_bounds = array<i64: 1, 8, 4>}, {transform_indices = @transform_11, window_bounds = array<i64: 1, 8, 4>}]} {
    %c0 = arith.constant 0 : index
    %c0_0 = arith.constant 0 : index
    %c0_1 = arith.constant 0 : index
    %0 = vector.load %arg2[%c0, %c0_0, %c0_1] : memref<1x8x4xf32, #tpu.memory_space<vmem>>, vector<1x8x4xf32>
    %1 = vector.shape_cast %0 : vector<1x8x4xf32> to vector<8x4xf32>
    %c0_2 = arith.constant 0 : index
    %c0_3 = arith.constant 0 : index
    %c0_4 = arith.constant 0 : index
    %2 = vector.load %arg6[%c0_2, %c0_3, %c0_4] : memref<1x1x4xf32, #tpu.memory_space<vmem>>, vector<1x1x4xf32>
    %3 = vector.shape_cast %2 : vector<1x1x4xf32> to vector<1x4xf32>
    %4 = vector.broadcast %3 : vector<1x4xf32> to vector<8x4xf32>
    %5 = arith.addf %1, %4 : vector<8x4xf32>
    %c0_5 = arith.constant 0 : index
    %c0_6 = arith.constant 0 : index
    %c0_7 = arith.constant 0 : index
    %c0_8 = arith.constant 0 : index
    %6 = vector.load %arg3[%c0_5, %c0_6, %c0_7, %c0_8] : memref<1x1x8x4xf32, #tpu.memory_space<vmem>>, vector<1x1x8x4xf32>
    %7 = vector.shape_cast %6 : vector<1x1x8x4xf32> to vector<8x4xf32>
    %c0_9 = arith.constant 0 : index
    %c0_10 = arith.constant 0 : index
    %c0_11 = arith.constant 0 : index
    %c0_12 = arith.constant 0 : index
    %8 = vector.load %arg4[%c0_9, %c0_10, %c0_11, %c0_12] : memref<1x1x8x4xf32, #tpu.memory_space<vmem>>, vector<1x1x8x4xf32>
    %9 = vector.shape_cast %8 : vector<1x1x8x4xf32> to vector<8x4xf32>
    %10 = tpu.iota {dimensions = array<i32: 0>} : vector<8x1xi32>
    %c2_i32 = arith.constant 2 : i32
    %11 = vector.broadcast %c2_i32 : i32 to vector<8x1xi32>
    %12 = arith.cmpi slt, %10, %11 : vector<8x1xi32>
    %c2_i32_13 = arith.constant 2 : i32
    %13 = tpu.dynamic_rotate %5 by %c2_i32_13 dim 0 : vector<8x4xf32>, i32 -> vector<8x4xf32>
    %14 = vector.shape_cast %12 : vector<8x1xi1> to vector<8x1xi1>
    %15 = vector.broadcast %14 : vector<8x1xi1> to vector<8x4xi1>
    %16 = arith.select %15, %7, %13 : vector<8x4xi1>, vector<8x4xf32>
    %c6_i32 = arith.constant 6 : i32
    %17 = vector.broadcast %c6_i32 : i32 to vector<8x1xi32>
    %18 = arith.cmpi sge, %10, %17 : vector<8x1xi32>
    %c6_i32_14 = arith.constant 6 : i32
    %19 = tpu.dynamic_rotate %5 by %c6_i32_14 dim 0 : vector<8x4xf32>, i32 -> vector<8x4xf32>
    %20 = vector.shape_cast %18 : vector<8x1xi1> to vector<8x1xi1>
    %21 = vector.broadcast %20 : vector<8x1xi1> to vector<8x4xi1>
    %22 = arith.select %21, %9, %19 : vector<8x4xi1>, vector<8x4xf32>
    %23 = arith.truncf %16 : vector<8x4xf32> to vector<8x4xbf16>
    %24 = arith.truncf %5 : vector<8x4xf32> to vector<8x4xbf16>
    %25 = arith.truncf %22 : vector<8x4xf32> to vector<8x4xbf16>
    %c0_15 = arith.constant 0 : index
    %c0_16 = arith.constant 0 : index
    %c0_17 = arith.constant 0 : index
    %26 = vector.load %arg5[%c0_15, %c0_16, %c0_17] : memref<1x8x8xf32, #tpu.memory_space<vmem>>, vector<1x8x8xf32>
    %27 = vector.shape_cast %26 : vector<1x8x8xf32> to vector<8x8xf32>
    %28 = arith.truncf %27 : vector<8x8xf32> to vector<8x8xbf16>
    %c0_18 = arith.constant 0 : index
    %c0_19 = arith.constant 0 : index
    %c0_20 = arith.constant 0 : index
    %29 = vector.load %arg7[%c0_18, %c0_19, %c0_20] : memref<6x4x4xbf16, #tpu.memory_space<vmem>>, vector<6x4x4xbf16>
    %c0_21 = arith.constant 0 : index
    %c0_22 = arith.constant 0 : index
    %c0_23 = arith.constant 0 : index
    %30 = vector.load %arg8[%c0_21, %c0_22, %c0_23] : memref<2x8x4xbf16, #tpu.memory_space<vmem>>, vector<2x8x4xbf16>
    %c0_24 = arith.constant 0 : index
    %c0_25 = arith.constant 0 : index
    %c0_26 = arith.constant 0 : index
    %31 = vector.load %arg9[%c0_24, %c0_25, %c0_26] : memref<2x1x4xf32, #tpu.memory_space<vmem>>, vector<2x1x4xf32>
    %c0_27 = arith.constant 0 : index
    %c0_28 = arith.constant 0 : index
    %c0_29 = arith.constant 0 : index
    %32 = vector.load %arg10[%c0_27, %c0_28, %c0_29] : memref<2x4x4xbf16, #tpu.memory_space<vmem>>, vector<2x4x4xbf16>
    %c0_30 = arith.constant 0 : index
    %c0_31 = arith.constant 0 : index
    %c0_32 = arith.constant 0 : index
    %33 = vector.load %arg11[%c0_30, %c0_31, %c0_32] : memref<2x1x4xf32, #tpu.memory_space<vmem>>, vector<2x1x4xf32>
    %34 = vector.extract_strided_slice %29 {offsets = [0, 0, 0], sizes = [1, 4, 4], strides = [1, 1, 1]} : vector<6x4x4xbf16> to vector<1x4x4xbf16>
    %35 = vector.shape_cast %34 : vector<1x4x4xbf16> to vector<4x4xbf16>
    %cst = arith.constant dense<0.000000e+00> : vector<8x4xf32>
    %36 = tpu.matmul %23, %35, %cst {dimension_numbers = #tpu.dot_dimension_numbers<[1], [0], [0], [1], [0, 0, 1, 1], [], []>} : vector<8x4xbf16>, vector<4x4xbf16>, vector<8x4xf32> -> vector<8x4xf32>
    %37 = vector.extract_strided_slice %29 {offsets = [1, 0, 0], sizes = [1, 4, 4], strides = [1, 1, 1]} : vector<6x4x4xbf16> to vector<1x4x4xbf16>
    %38 = vector.shape_cast %37 : vector<1x4x4xbf16> to vector<4x4xbf16>
    %cst_33 = arith.constant dense<0.000000e+00> : vector<8x4xf32>
    %39 = tpu.matmul %24, %38, %cst_33 {dimension_numbers = #tpu.dot_dimension_numbers<[1], [0], [0], [1], [0, 0, 1, 1], [], []>} : vector<8x4xbf16>, vector<4x4xbf16>, vector<8x4xf32> -> vector<8x4xf32>
    %40 = arith.addf %36, %39 : vector<8x4xf32>
    %41 = vector.extract_strided_slice %29 {offsets = [2, 0, 0], sizes = [1, 4, 4], strides = [1, 1, 1]} : vector<6x4x4xbf16> to vector<1x4x4xbf16>
    %42 = vector.shape_cast %41 : vector<1x4x4xbf16> to vector<4x4xbf16>
    %cst_34 = arith.constant dense<0.000000e+00> : vector<8x4xf32>
    %43 = tpu.matmul %25, %42, %cst_34 {dimension_numbers = #tpu.dot_dimension_numbers<[1], [0], [0], [1], [0, 0, 1, 1], [], []>} : vector<8x4xbf16>, vector<4x4xbf16>, vector<8x4xf32> -> vector<8x4xf32>
    %44 = arith.addf %40, %43 : vector<8x4xf32>
    %45 = vector.extract_strided_slice %30 {offsets = [0, 0, 0], sizes = [1, 8, 4], strides = [1, 1, 1]} : vector<2x8x4xbf16> to vector<1x8x4xbf16>
    %46 = vector.shape_cast %45 : vector<1x8x4xbf16> to vector<8x4xbf16>
    %cst_35 = arith.constant dense<0.000000e+00> : vector<8x4xf32>
    %47 = tpu.matmul %28, %46, %cst_35 {dimension_numbers = #tpu.dot_dimension_numbers<[1], [0], [0], [1], [0, 0, 1, 1], [], []>} : vector<8x8xbf16>, vector<8x4xbf16>, vector<8x4xf32> -> vector<8x4xf32>
    %48 = arith.addf %44, %47 : vector<8x4xf32>
    %49 = vector.extract_strided_slice %31 {offsets = [0, 0, 0], sizes = [1, 1, 4], strides = [1, 1, 1]} : vector<2x1x4xf32> to vector<1x1x4xf32>
    %50 = vector.shape_cast %49 : vector<1x1x4xf32> to vector<1x4xf32>
    %51 = vector.broadcast %50 : vector<1x4xf32> to vector<8x4xf32>
    %52 = arith.addf %48, %51 : vector<8x4xf32>
    %53 = vector.extract_strided_slice %29 {offsets = [3, 0, 0], sizes = [1, 4, 4], strides = [1, 1, 1]} : vector<6x4x4xbf16> to vector<1x4x4xbf16>
    %54 = vector.shape_cast %53 : vector<1x4x4xbf16> to vector<4x4xbf16>
    %cst_36 = arith.constant dense<0.000000e+00> : vector<8x4xf32>
    %55 = tpu.matmul %23, %54, %cst_36 {dimension_numbers = #tpu.dot_dimension_numbers<[1], [0], [0], [1], [0, 0, 1, 1], [], []>} : vector<8x4xbf16>, vector<4x4xbf16>, vector<8x4xf32> -> vector<8x4xf32>
    %56 = vector.extract_strided_slice %29 {offsets = [4, 0, 0], sizes = [1, 4, 4], strides = [1, 1, 1]} : vector<6x4x4xbf16> to vector<1x4x4xbf16>
    %57 = vector.shape_cast %56 : vector<1x4x4xbf16> to vector<4x4xbf16>
    %cst_37 = arith.constant dense<0.000000e+00> : vector<8x4xf32>
    %58 = tpu.matmul %24, %57, %cst_37 {dimension_numbers = #tpu.dot_dimension_numbers<[1], [0], [0], [1], [0, 0, 1, 1], [], []>} : vector<8x4xbf16>, vector<4x4xbf16>, vector<8x4xf32> -> vector<8x4xf32>
    %59 = arith.addf %55, %58 : vector<8x4xf32>
    %60 = vector.extract_strided_slice %29 {offsets = [5, 0, 0], sizes = [1, 4, 4], strides = [1, 1, 1]} : vector<6x4x4xbf16> to vector<1x4x4xbf16>
    %61 = vector.shape_cast %60 : vector<1x4x4xbf16> to vector<4x4xbf16>
    %cst_38 = arith.constant dense<0.000000e+00> : vector<8x4xf32>
    %62 = tpu.matmul %25, %61, %cst_38 {dimension_numbers = #tpu.dot_dimension_numbers<[1], [0], [0], [1], [0, 0, 1, 1], [], []>} : vector<8x4xbf16>, vector<4x4xbf16>, vector<8x4xf32> -> vector<8x4xf32>
    %63 = arith.addf %59, %62 : vector<8x4xf32>
    %64 = vector.extract_strided_slice %30 {offsets = [1, 0, 0], sizes = [1, 8, 4], strides = [1, 1, 1]} : vector<2x8x4xbf16> to vector<1x8x4xbf16>
    %65 = vector.shape_cast %64 : vector<1x8x4xbf16> to vector<8x4xbf16>
    %cst_39 = arith.constant dense<0.000000e+00> : vector<8x4xf32>
    %66 = tpu.matmul %28, %65, %cst_39 {dimension_numbers = #tpu.dot_dimension_numbers<[1], [0], [0], [1], [0, 0, 1, 1], [], []>} : vector<8x8xbf16>, vector<8x4xbf16>, vector<8x4xf32> -> vector<8x4xf32>
    %67 = arith.addf %63, %66 : vector<8x4xf32>
    %68 = vector.extract_strided_slice %31 {offsets = [1, 0, 0], sizes = [1, 1, 4], strides = [1, 1, 1]} : vector<2x1x4xf32> to vector<1x1x4xf32>
    %69 = vector.shape_cast %68 : vector<1x1x4xf32> to vector<1x4xf32>
    %70 = vector.broadcast %69 : vector<1x4xf32> to vector<8x4xf32>
    %71 = arith.addf %67, %70 : vector<8x4xf32>
    %72 = arith.negf %52 : vector<8x4xf32>
    %73 = math.exp %72 : vector<8x4xf32>
    %cst_40 = arith.constant 1.000000e+00 : f32
    %74 = vector.broadcast %cst_40 : f32 to vector<8x4xf32>
    %75 = arith.addf %74, %73 : vector<8x4xf32>
    %76 = arith.divf %74, %75 : vector<8x4xf32>
    %77 = math.tanh %71 : vector<8x4xf32>
    %78 = arith.mulf %76, %77 : vector<8x4xf32>
    %79 = arith.truncf %78 : vector<8x4xf32> to vector<8x4xbf16>
    %80 = vector.extract_strided_slice %32 {offsets = [0, 0, 0], sizes = [1, 4, 4], strides = [1, 1, 1]} : vector<2x4x4xbf16> to vector<1x4x4xbf16>
    %81 = vector.shape_cast %80 : vector<1x4x4xbf16> to vector<4x4xbf16>
    %cst_41 = arith.constant dense<0.000000e+00> : vector<8x4xf32>
    %82 = tpu.matmul %79, %81, %cst_41 {dimension_numbers = #tpu.dot_dimension_numbers<[1], [0], [0], [1], [0, 0, 1, 1], [], []>} : vector<8x4xbf16>, vector<4x4xbf16>, vector<8x4xf32> -> vector<8x4xf32>
    %83 = vector.extract_strided_slice %33 {offsets = [0, 0, 0], sizes = [1, 1, 4], strides = [1, 1, 1]} : vector<2x1x4xf32> to vector<1x1x4xf32>
    %84 = vector.shape_cast %83 : vector<1x1x4xf32> to vector<1x4xf32>
    %85 = vector.broadcast %84 : vector<1x4xf32> to vector<8x4xf32>
    %86 = arith.addf %82, %85 : vector<8x4xf32>
    %87 = vector.extract_strided_slice %32 {offsets = [1, 0, 0], sizes = [1, 4, 4], strides = [1, 1, 1]} : vector<2x4x4xbf16> to vector<1x4x4xbf16>
    %88 = vector.shape_cast %87 : vector<1x4x4xbf16> to vector<4x4xbf16>
    %cst_42 = arith.constant dense<0.000000e+00> : vector<8x4xf32>
    %89 = tpu.matmul %79, %88, %cst_42 {dimension_numbers = #tpu.dot_dimension_numbers<[1], [0], [0], [1], [0, 0, 1, 1], [], []>} : vector<8x4xbf16>, vector<4x4xbf16>, vector<8x4xf32> -> vector<8x4xf32>
    %90 = vector.extract_strided_slice %33 {offsets = [1, 0, 0], sizes = [1, 1, 4], strides = [1, 1, 1]} : vector<2x1x4xf32> to vector<1x1x4xf32>
    %91 = vector.shape_cast %90 : vector<1x1x4xf32> to vector<1x4xf32>
    %92 = vector.broadcast %91 : vector<1x4xf32> to vector<8x4xf32>
    %93 = arith.addf %89, %92 : vector<8x4xf32>
    %94 = arith.addf %1, %86 : vector<8x4xf32>
    %cst_43 = arith.constant 0.707106769 : f32
    %95 = vector.broadcast %cst_43 : f32 to vector<8x4xf32>
    %96 = arith.mulf %94, %95 : vector<8x4xf32>
    %c0_44 = arith.constant 0 : index
    %c0_45 = arith.constant 0 : index
    %c0_46 = arith.constant 0 : index
    %97 = vector.load %arg12[%c0_44, %c0_45, %c0_46] : memref<1x8x4xf32, #tpu.memory_space<vmem>>, vector<1x8x4xf32>
    %98 = vector.shape_cast %97 : vector<1x8x4xf32> to vector<8x4xf32>
    %99 = vector.shape_cast %96 : vector<8x4xf32> to vector<1x8x4xf32>
    tpu.vector_store %arg12[%c0_44, %c0_45, %c0_46], %99 {strides = array<i32>} : memref<1x8x4xf32, #tpu.memory_space<vmem>>, vector<1x8x4xf32>,
    %c0_47 = arith.constant 0 : index
    %c0_48 = arith.constant 0 : index
    %c0_49 = arith.constant 0 : index
    %100 = vector.load %arg13[%c0_47, %c0_48, %c0_49] : memref<1x8x4xf32, #tpu.memory_space<vmem>>, vector<1x8x4xf32>
    %101 = vector.shape_cast %100 : vector<1x8x4xf32> to vector<8x4xf32>
    %102 = vector.shape_cast %93 : vector<8x4xf32> to vector<1x8x4xf32>
    tpu.vector_store %arg13[%c0_47, %c0_48, %c0_49], %102 {strides = array<i32>} : memref<1x8x4xf32, #tpu.memory_space<vmem>>, vector<1x8x4xf32>,
    return
  }
  func.func @transform_0(%arg0: i32, %arg1: i32) -> (i32, i32, i32) {
    %c0_i32 = arith.constant 0 : i32
    %c0_i32_0 = arith.constant 0 : i32
    return %arg0, %arg1, %c0_i32 : i32, i32, i32
  }
  func.func @transform_1(%arg0: i32, %arg1: i32) -> (i32, i32, i32, i32) {
    %c0_i32 = arith.constant 0 : i32
    %c0_i32_0 = arith.constant 0 : i32
    %c0_i32_1 = arith.constant 0 : i32
    return %arg0, %arg1, %c0_i32, %c0_i32_0 : i32, i32, i32, i32
  }
  func.func @transform_2(%arg0: i32, %arg1: i32) -> (i32, i32, i32, i32) {
    %c0_i32 = arith.constant 0 : i32
    %c0_i32_0 = arith.constant 0 : i32
    %c0_i32_1 = arith.constant 0 : i32
    return %arg0, %arg1, %c0_i32, %c0_i32_0 : i32, i32, i32, i32
  }
  func.func @transform_3(%arg0: i32, %arg1: i32) -> (i32, i32, i32) {
    %c0_i32 = arith.constant 0 : i32
    %c0_i32_0 = arith.constant 0 : i32
    return %arg0, %arg1, %c0_i32 : i32, i32, i32
  }
  func.func @transform_4(%arg0: i32, %arg1: i32) -> (i32, i32, i32) {
    %c0_i32 = arith.constant 0 : i32
    %c0_i32_0 = arith.constant 0 : i32
    %c0_i32_1 = arith.constant 0 : i32
    return %arg0, %c0_i32, %c0_i32_0 : i32, i32, i32
  }
  func.func @transform_5(%arg0: i32, %arg1: i32) -> (i32, i32, i32) {
    %c0_i32 = arith.constant 0 : i32
    %c0_i32_0 = arith.constant 0 : i32
    %c0_i32_1 = arith.constant 0 : i32
    %c0_i32_2 = arith.constant 0 : i32
    return %c0_i32, %c0_i32_0, %c0_i32_1 : i32, i32, i32
  }
  func.func @transform_6(%arg0: i32, %arg1: i32) -> (i32, i32, i32) {
    %c0_i32 = arith.constant 0 : i32
    %c0_i32_0 = arith.constant 0 : i32
    %c0_i32_1 = arith.constant 0 : i32
    %c0_i32_2 = arith.constant 0 : i32
    return %c0_i32, %c0_i32_0, %c0_i32_1 : i32, i32, i32
  }
  func.func @transform_7(%arg0: i32, %arg1: i32) -> (i32, i32, i32) {
    %c0_i32 = arith.constant 0 : i32
    %c0_i32_0 = arith.constant 0 : i32
    %c0_i32_1 = arith.constant 0 : i32
    %c0_i32_2 = arith.constant 0 : i32
    return %c0_i32, %c0_i32_0, %c0_i32_1 : i32, i32, i32
  }
  func.func @transform_8(%arg0: i32, %arg1: i32) -> (i32, i32, i32) {
    %c0_i32 = arith.constant 0 : i32
    %c0_i32_0 = arith.constant 0 : i32
    %c0_i32_1 = arith.constant 0 : i32
    %c0_i32_2 = arith.constant 0 : i32
    return %c0_i32, %c0_i32_0, %c0_i32_1 : i32, i32, i32
  }
  func.func @transform_9(%arg0: i32, %arg1: i32) -> (i32, i32, i32) {
    %c0_i32 = arith.constant 0 : i32
    %c0_i32_0 = arith.constant 0 : i32
    %c0_i32_1 = arith.constant 0 : i32
    %c0_i32_2 = arith.constant 0 : i32
    return %c0_i32, %c0_i32_0, %c0_i32_1 : i32, i32, i32
  }
  func.func @transform_10(%arg0: i32, %arg1: i32) -> (i32, i32, i32) {
    %c0_i32 = arith.constant 0 : i32
    %c0_i32_0 = arith.constant 0 : i32
    return %arg0, %arg1, %c0_i32 : i32, i32, i32
  }
  func.func @transform_11(%arg0: i32, %arg1: i32) -> (i32, i32, i32) {
    %c0_i32 = arith.constant 0 : i32
    %c0_i32_0 = arith.constant 0 : i32
    return %arg0, %arg1, %c0_i32 : i32, i32, i32
  }
}

</mosaic_0001>

<llo_original>
// kernel: tpu_custom_call.1
$region0: #{tpu_custom_call.1}
  #allocation0 [shape = 'u32[]', space=smem, size = 0x4, offset = 0x4, fixed_abs, tag = 'smem constant byte address 0x4 - core index']
  #allocation1 [shape = 'u32[144,128]{1,0:T(1,128)}', space=vmem, size = 0x12000, scoped, tag = 'internal scratch']
  %s0 = inlined_call_operand.vmem [shape: f32[2,32,4], index: 0, kind: input, shape index: {}]
  %s1 = inlined_call_operand.vmem [shape: f32[2,4,8,4], index: 1, kind: input, shape index: {}]
  %s2 = inlined_call_operand.vmem [shape: f32[2,4,8,4], index: 2, kind: input, shape index: {}]
  %s3 = inlined_call_operand.vmem [shape: f32[2,32,8], index: 3, kind: input, shape index: {}]
  %s4 = inlined_call_operand.vmem [shape: f32[2,1,4], index: 4, kind: input, shape index: {}]
  %s5 = inlined_call_operand.vmem [shape: bf16[6,4,4], index: 5, kind: input, shape index: {}]
  %s6 = inlined_call_operand.vmem [shape: bf16[2,8,4], index: 6, kind: input, shape index: {}]
  %s7 = inlined_call_operand.vmem [shape: f32[2,1,4], index: 7, kind: input, shape index: {}]
  %s8 = inlined_call_operand.vmem [shape: bf16[2,4,4], index: 8, kind: input, shape index: {}]
  %s9 = inlined_call_operand.vmem [shape: f32[2,1,4], index: 9, kind: input, shape index: {}]
  %s10 = inlined_call_operand.vmem [shape: f32[2,32,4], index: 10, kind: output, shape index: {0}]
  %s11 = inlined_call_operand.vmem [shape: f32[2,32,4], index: 11, kind: output, shape index: {1}]
  %12 = xla_tuple %s10, %s11
  %s13 = sld [smem:[#allocation0]]
  $region81: #{tpu_custom_call.1} parent=0
    _
  %s15 = ssub.s32 1, %s13
  %s16 = scalar_select 0, %s15, %s13
  loop: start=0, step=1, limit=10
  $region2: #{tpu_custom_call.1} parent=0 // loop_pre_header
    _
  $region3: #{tpu_custom_call.1} parent=0 // loop_header
    %s18 = sphi 0, %s22
    %p19 = scmp.ge.s32.totalorder %s18, 10
    %s25 = sphi 0, %s37
    %s26 = sphi 0, %s33
    %s27 = sphi 0, %s25
    %s28 = sphi 0, %s26
    %s29 = sphi 0, %s27
    %s30 = sphi 0, %s28
    %s42 = sphi 0, %s44
    %s45 = sphi 0, %s42
    %s46 = sphi 0, %s45
    %s62 = sphi 0, %s46
    %s70 = sphi 0, %s72
    %s73 = sphi 0, %s70
    %s74 = sphi 0, %s73
    %s90 = sphi 0, %s74
    %s98 = sphi 0, %s100
    %s101 = sphi 0, %s98
    %s102 = sphi 0, %s101
    %s118 = sphi 0, %s102
    %s126 = sphi 0, %s128
    %s129 = sphi 0, %s126
    %s130 = sphi 0, %s129
    %s146 = sphi 0, %s130
    %s152 = sphi 0, %s154
    %s155 = sphi 0, %s152
    %s156 = sphi 0, %s155
    %s172 = sphi 0, %s156
    %s176 = sphi 0, %s176
    %s178 = sphi 0, %s176
    %s179 = sphi 0, %s178
    %s193 = sphi 0, %s179
    %s197 = sphi 0, %s197
    %s199 = sphi 0, %s197
    %s200 = sphi 0, %s199
    %s214 = sphi 0, %s200
    %s218 = sphi 0, %s218
    %s220 = sphi 0, %s218
    %s221 = sphi 0, %s220
    %s235 = sphi 0, %s221
    %s239 = sphi 0, %s239
    %s241 = sphi 0, %s239
    %s242 = sphi 0, %s241
    %s256 = sphi 0, %s242
    %s260 = sphi 0, %s260
    %s262 = sphi 0, %s260
    %s263 = sphi 0, %s262
    %s277 = sphi 0, %s263
    %s285 = sphi 0, %s287
    %s288 = sphi 0, %s285
    %s289 = sphi 0, %s288
    %s305 = sphi 0, %s289
    %s313 = sphi 0, %s315
    %s316 = sphi 0, %s313
    %s317 = sphi 0, %s316
    %s333 = sphi 0, %s317
  $region4: #{tpu_custom_call.1} parent=0 // loop_header_branch
    %21 = sbr.rel (%p19) target = $region8
  $region5: #{tpu_custom_call.1} parent=0 // loop_body
    %s23 = ssub.s32 %s18, 1
    %s24 = ssub.s32 %s18, 2
    %s31 = sadd.s32 1, %s26
    %p32 = scmp.ge.s32.totalorder %s31, 4
    %s33 = scalar_select %p32, 0, %s31
    %s34 = sadd.s32 1, %s25
    %s35 = scalar_select %p32, %s34, %s25
    %p36 = scmp.ge.s32.totalorder %s35, 2
    %s37 = scalar_select %p36, 0, %s35
    %s38 = ssub.s32 %s25, %s37
    %s39 = ssub.s32 %s26, %s33
    %s40 = sor.u32 %s38, %s39
    %p41 = scmp.eq.s32.totalorder %s40, 0
    %s43 = sadd.s32 %s42, 1
    %s44 = scalar_select %p41, %s42, %s43
    %p47 = pneg %p41
    %p48 = scmp.eq.s32.totalorder %s18, 7
    %p49 = por %p47, %p48
    %p50 = scmp.ne.s32.totalorder %s42, %s45
    %p51 = scmp.eq.s32.totalorder %s18, 0
    %p52 = por %p50, %p51
    %p53 = scmp.ne.s32.totalorder %s42, %s45
    %p54 = scmp.eq.s32.totalorder %s23, 7
    %p55 = por %p53, %p54
    %p56 = scmp.ne.s32.totalorder %s45, %s46
    %p57 = scmp.eq.s32.totalorder %s23, 0
    %p58 = por %p56, %p57
    %p59 = scmp.ne.s32.totalorder %s45, %s46
    %p60 = scmp.eq.s32.totalorder %s24, 7
    %p61 = por %p59, %p60
    %p63 = scmp.ne.s32.totalorder %s46, %s62
    %p64 = scmp.eq.s32.totalorder %s24, 0
    %p65 = por %p63, %p64
    %s66 = ssub.s32 %s25, %s37
    %s67 = ssub.s32 %s26, %s33
    %s68 = sor.u32 %s66, %s67
    %p69 = scmp.eq.s32.totalorder %s68, 0
    %s71 = sadd.s32 %s70, 1
    %s72 = scalar_select %p69, %s70, %s71
    %p75 = pneg %p69
    %p76 = scmp.eq.s32.totalorder %s18, 7
    %p77 = por %p75, %p76
    %p78 = scmp.ne.s32.totalorder %s70, %s73
    %p79 = scmp.eq.s32.totalorder %s18, 0
    %p80 = por %p78, %p79
    %p81 = scmp.ne.s32.totalorder %s70, %s73
    %p82 = scmp.eq.s32.totalorder %s23, 7
    %p83 = por %p81, %p82
    %p84 = scmp.ne.s32.totalorder %s73, %s74
    %p85 = scmp.eq.s32.totalorder %s23, 0
    %p86 = por %p84, %p85
    %p87 = scmp.ne.s32.totalorder %s73, %s74
    %p88 = scmp.eq.s32.totalorder %s24, 7
    %p89 = por %p87, %p88
    %p91 = scmp.ne.s32.totalorder %s74, %s90
    %p92 = scmp.eq.s32.totalorder %s24, 0
    %p93 = por %p91, %p92
    %s94 = ssub.s32 %s25, %s37
    %s95 = ssub.s32 %s26, %s33
    %s96 = sor.u32 %s94, %s95
    %p97 = scmp.eq.s32.totalorder %s96, 0
    %s99 = sadd.s32 %s98, 1
    %s100 = scalar_select %p97, %s98, %s99
    %p103 = pneg %p97
    %p104 = scmp.eq.s32.totalorder %s18, 7
    %p105 = por %p103, %p104
    %p106 = scmp.ne.s32.totalorder %s98, %s101
    %p107 = scmp.eq.s32.totalorder %s18, 0
    %p108 = por %p106, %p107
    %p109 = scmp.ne.s32.totalorder %s98, %s101
    %p110 = scmp.eq.s32.totalorder %s23, 7
    %p111 = por %p109, %p110
    %p112 = scmp.ne.s32.totalorder %s101, %s102
    %p113 = scmp.eq.s32.totalorder %s23, 0
    %p114 = por %p112, %p113
    %p115 = scmp.ne.s32.totalorder %s101, %s102
    %p116 = scmp.eq.s32.totalorder %s24, 7
    %p117 = por %p115, %p116
    %p119 = scmp.ne.s32.totalorder %s102, %s118
    %p120 = scmp.eq.s32.totalorder %s24, 0
    %p121 = por %p119, %p120
    %s122 = ssub.s32 %s25, %s37
    %s123 = ssub.s32 %s26, %s33
    %s124 = sor.u32 %s122, %s123
    %p125 = scmp.eq.s32.totalorder %s124, 0
    %s127 = sadd.s32 %s126, 1
    %s128 = scalar_select %p125, %s126, %s127
    %p131 = pneg %p125
    %p132 = scmp.eq.s32.totalorder %s18, 7
    %p133 = por %p131, %p132
    %p134 = scmp.ne.s32.totalorder %s126, %s129
    %p135 = scmp.eq.s32.totalorder %s18, 0
    %p136 = por %p134, %p135
    %p137 = scmp.ne.s32.totalorder %s126, %s129
    %p138 = scmp.eq.s32.totalorder %s23, 7
    %p139 = por %p137, %p138
    %p140 = scmp.ne.s32.totalorder %s129, %s130
    %p141 = scmp.eq.s32.totalorder %s23, 0
    %p142 = por %p140, %p141
    %p143 = scmp.ne.s32.totalorder %s129, %s130
    %p144 = scmp.eq.s32.totalorder %s24, 7
    %p145 = por %p143, %p144
    %p147 = scmp.ne.s32.totalorder %s130, %s146
    %p148 = scmp.eq.s32.totalorder %s24, 0
    %p149 = por %p147, %p148
    %s150 = ssub.s32 %s25, %s37
    %p151 = scmp.eq.s32.totalorder %s150, 0
    %s153 = sadd.s32 %s152, 1
    %s154 = scalar_select %p151, %s152, %s153
    %p157 = pneg %p151
    %p158 = scmp.eq.s32.totalorder %s18, 7
    %p159 = por %p157, %p158
    %p160 = scmp.ne.s32.totalorder %s152, %s155
    %p161 = scmp.eq.s32.totalorder %s18, 0
    %p162 = por %p160, %p161
    %p163 = scmp.ne.s32.totalorder %s152, %s155
    %p164 = scmp.eq.s32.totalorder %s23, 7
    %p165 = por %p163, %p164
    %p166 = scmp.ne.s32.totalorder %s155, %s156
    %p167 = scmp.eq.s32.totalorder %s23, 0
    %p168 = por %p166, %p167
    %p169 = scmp.ne.s32.totalorder %s155, %s156
    %p170 = scmp.eq.s32.totalorder %s24, 7
    %p171 = por %p169, %p170
    %p173 = scmp.ne.s32.totalorder %s156, %s172
    %p174 = scmp.eq.s32.totalorder %s24, 0
    %p175 = por %p173, %p174
    %s177 = sadd.s32 %s176, 1
    %p180 = scmp.eq.s32.totalorder %s18, 7
    %p181 = scmp.ne.s32.totalorder %s176, %s178
    %p182 = scmp.eq.s32.totalorder %s18, 0
    %p183 = por %p181, %p182
    %p184 = scmp.ne.s32.totalorder %s176, %s178
    %p185 = scmp.eq.s32.totalorder %s23, 7
    %p186 = por %p184, %p185
    %p187 = scmp.ne.s32.totalorder %s178, %s179
    %p188 = scmp.eq.s32.totalorder %s23, 0
    %p189 = por %p187, %p188
    %p190 = scmp.ne.s32.totalorder %s178, %s179
    %p191 = scmp.eq.s32.totalorder %s24, 7
    %p192 = por %p190, %p191
    %p194 = scmp.ne.s32.totalorder %s179, %s193
    %p195 = scmp.eq.s32.totalorder %s24, 0
    %p196 = por %p194, %p195
    %s198 = sadd.s32 %s197, 1
    %p201 = scmp.eq.s32.totalorder %s18, 7
    %p202 = scmp.ne.s32.totalorder %s197, %s199
    %p203 = scmp.eq.s32.totalorder %s18, 0
    %p204 = por %p202, %p203
    %p205 = scmp.ne.s32.totalorder %s197, %s199
    %p206 = scmp.eq.s32.totalorder %s23, 7
    %p207 = por %p205, %p206
    %p208 = scmp.ne.s32.totalorder %s199, %s200
    %p209 = scmp.eq.s32.totalorder %s23, 0
    %p210 = por %p208, %p209
    %p211 = scmp.ne.s32.totalorder %s199, %s200
    %p212 = scmp.eq.s32.totalorder %s24, 7
    %p213 = por %p211, %p212
    %p215 = scmp.ne.s32.totalorder %s200, %s214
    %p216 = scmp.eq.s32.totalorder %s24, 0
    %p217 = por %p215, %p216
    %s219 = sadd.s32 %s218, 1
    %p222 = scmp.eq.s32.totalorder %s18, 7
    %p223 = scmp.ne.s32.totalorder %s218, %s220
    %p224 = scmp.eq.s32.totalorder %s18, 0
    %p225 = por %p223, %p224
    %p226 = scmp.ne.s32.totalorder %s218, %s220
    %p227 = scmp.eq.s32.totalorder %s23, 7
    %p228 = por %p226, %p227
    %p229 = scmp.ne.s32.totalorder %s220, %s221
    %p230 = scmp.eq.s32.totalorder %s23, 0
    %p231 = por %p229, %p230
    %p232 = scmp.ne.s32.totalorder %s220, %s221
    %p233 = scmp.eq.s32.totalorder %s24, 7
    %p234 = por %p232, %p233
    %p236 = scmp.ne.s32.totalorder %s221, %s235
    %p237 = scmp.eq.s32.totalorder %s24, 0
    %p238 = por %p236, %p237
    %s240 = sadd.s32 %s239, 1
    %p243 = scmp.eq.s32.totalorder %s18, 7
    %p244 = scmp.ne.s32.totalorder %s239, %s241
    %p245 = scmp.eq.s32.totalorder %s18, 0
    %p246 = por %p244, %p245
    %p247 = scmp.ne.s32.totalorder %s239, %s241
    %p248 = scmp.eq.s32.totalorder %s23, 7
    %p249 = por %p247, %p248
    %p250 = scmp.ne.s32.totalorder %s241, %s242
    %p251 = scmp.eq.s32.totalorder %s23, 0
    %p252 = por %p250, %p251
    %p253 = scmp.ne.s32.totalorder %s241, %s242
    %p254 = scmp.eq.s32.totalorder %s24, 7
    %p255 = por %p253, %p254
    %p257 = scmp.ne.s32.totalorder %s242, %s256
    %p258 = scmp.eq.s32.totalorder %s24, 0
    %p259 = por %p257, %p258
    %s261 = sadd.s32 %s260, 1
    %p264 = scmp.eq.s32.totalorder %s18, 7
    %p265 = scmp.ne.s32.totalorder %s260, %s262
    %p266 = scmp.eq.s32.totalorder %s18, 0
    %p267 = por %p265, %p266
    %p268 = scmp.ne.s32.totalorder %s260, %s262
    %p269 = scmp.eq.s32.totalorder %s23, 7
    %p270 = por %p268, %p269
    %p271 = scmp.ne.s32.totalorder %s262, %s263
    %p272 = scmp.eq.s32.totalorder %s23, 0
    %p273 = por %p271, %p272
    %p274 = scmp.ne.s32.totalorder %s262, %s263
    %p275 = scmp.eq.s32.totalorder %s24, 7
    %p276 = por %p274, %p275
    %p278 = scmp.ne.s32.totalorder %s263, %s277
    %p279 = scmp.eq.s32.totalorder %s24, 0
    %p280 = por %p278, %p279
    %s281 = ssub.s32 %s25, %s37
    %s282 = ssub.s32 %s26, %s33
    %s283 = sor.u32 %s281, %s282
    %p284 = scmp.eq.s32.totalorder %s283, 0
    %s286 = sadd.s32 %s285, 1
    %s287 = scalar_select %p284, %s285, %s286
    %p290 = pneg %p284
    %p291 = scmp.eq.s32.totalorder %s18, 7
    %p292 = por %p290, %p291
    %p293 = scmp.ne.s32.totalorder %s285, %s288
    %p294 = scmp.eq.s32.totalorder %s18, 0
    %p295 = por %p293, %p294
    %p296 = scmp.ne.s32.totalorder %s285, %s288
    %p297 = scmp.eq.s32.totalorder %s23, 7
    %p298 = por %p296, %p297
    %p299 = scmp.ne.s32.totalorder %s288, %s289
    %p300 = scmp.eq.s32.totalorder %s23, 0
    %p301 = por %p299, %p300
    %p302 = scmp.ne.s32.totalorder %s288, %s289
    %p303 = scmp.eq.s32.totalorder %s24, 7
    %p304 = por %p302, %p303
    %p306 = scmp.ne.s32.totalorder %s289, %s305
    %p307 = scmp.eq.s32.totalorder %s24, 0
    %p308 = por %p306, %p307
    %s309 = ssub.s32 %s25, %s37
    %s310 = ssub.s32 %s26, %s33
    %s311 = sor.u32 %s309, %s310
    %p312 = scmp.eq.s32.totalorder %s311, 0
    %s314 = sadd.s32 %s313, 1
    %s315 = scalar_select %p312, %s313, %s314
    %p318 = pneg %p312
    %p319 = scmp.eq.s32.totalorder %s18, 7
    %p320 = por %p318, %p319
    %p321 = scmp.ne.s32.totalorder %s313, %s316
    %p322 = scmp.eq.s32.totalorder %s18, 0
    %p323 = por %p321, %p322
    %p324 = scmp.ne.s32.totalorder %s313, %s316
    %p325 = scmp.eq.s32.totalorder %s23, 7
    %p326 = por %p324, %p325
    %p327 = scmp.ne.s32.totalorder %s316, %s317
    %p328 = scmp.eq.s32.totalorder %s23, 0
    %p329 = por %p327, %p328
    %p330 = scmp.ne.s32.totalorder %s316, %s317
    %p331 = scmp.eq.s32.totalorder %s24, 7
    %p332 = por %p330, %p331
    %p334 = scmp.ne.s32.totalorder %s317, %s333
    %p335 = scmp.eq.s32.totalorder %s24, 0
    %p336 = por %p334, %p335
    %p337 = scmp.le.s32.totalorder 1, %s18
    %p338 = scmp.lt.s32.totalorder %s18, 9
    %p339 = pnand %p337, %p338
    %p340 = pneg %p339
    // Predicated region
    $region9: #{tpu_custom_call.1} parent=5 // pred_check
      _
    $region10: #{tpu_custom_call.1} parent=5 // pred_check_branch
      %342 = sbr.rel (%p339) target = $region12
    $region11: #{tpu_custom_call.1} parent=5 // pred_region
      %s343 = ssub.s32 %s18, 1
      // Predicated region
      $region13: #{tpu_custom_call.1} parent=11 // pred_check
        %p344 = pneg %p189
      $region14: #{tpu_custom_call.1} parent=11 // pred_check_branch
        %346 = sbr.rel (%p344) target = $region16
      $region15: #{tpu_custom_call.1} parent=11 // pred_region
        _
      $region16: #{tpu_custom_call.1} parent=11 // pred_fallthru
        _
      // Predicated region
      $region17: #{tpu_custom_call.1} parent=11 // pred_check
        %p347 = pneg %p210
      $region18: #{tpu_custom_call.1} parent=11 // pred_check_branch
        %349 = sbr.rel (%p347) target = $region20
      $region19: #{tpu_custom_call.1} parent=11 // pred_region
        _
      $region20: #{tpu_custom_call.1} parent=11 // pred_fallthru
        _
      // Predicated region
      $region21: #{tpu_custom_call.1} parent=11 // pred_check
        %p350 = pneg %p231
      $region22: #{tpu_custom_call.1} parent=11 // pred_check_branch
        %352 = sbr.rel (%p350) target = $region24
      $region23: #{tpu_custom_call.1} parent=11 // pred_region
        _
      $region24: #{tpu_custom_call.1} parent=11 // pred_fallthru
        _
      // Predicated region
      $region25: #{tpu_custom_call.1} parent=11 // pred_check
        %p353 = pneg %p252
      $region26: #{tpu_custom_call.1} parent=11 // pred_check_branch
        %355 = sbr.rel (%p353) target = $region28
      $region27: #{tpu_custom_call.1} parent=11 // pred_region
        _
      $region28: #{tpu_custom_call.1} parent=11 // pred_fallthru
        _
      // Predicated region
      $region29: #{tpu_custom_call.1} parent=11 // pred_check
        %p356 = pneg %p273
      $region30: #{tpu_custom_call.1} parent=11 // pred_check_branch
        %358 = sbr.rel (%p356) target = $region32
      $region31: #{tpu_custom_call.1} parent=11 // pred_region
        _
      $region32: #{tpu_custom_call.1} parent=11 // pred_fallthru
        _
    $region12: #{tpu_custom_call.1} parent=5 // pred_fallthru
      _
    %p359 = scmp.lt.s32.totalorder %s18, 8
    // Predicated region
    $region33: #{tpu_custom_call.1} parent=5 // pred_check
      %p360 = pneg %p359
    $region34: #{tpu_custom_call.1} parent=5 // pred_check_branch
      %362 = sbr.rel (%p360) target = $region36
    $region35: #{tpu_custom_call.1} parent=5 // pred_region
      // Predicated region
      $region37: #{tpu_custom_call.1} parent=35 // pred_check
        %p363 = pneg %p52
      $region38: #{tpu_custom_call.1} parent=35 // pred_check_branch
        %365 = sbr.rel (%p363) target = $region40
      $region39: #{tpu_custom_call.1} parent=35 // pred_region
        %p366 = scmp.lt.s32.totalorder %s25, 1
        %s367 = scalar_select %p366, %s25, 1
        %p368 = scmp.lt.s32.totalorder %s26, 3
        %s369 = scalar_select %p368, %s26, 3
        %s370 = smul.addr %s367, 4
        %s371 = sadd.s32 %s369, %s370
        %s372 = smul.addr %s371, 8
        %s373 = scalar_lea.vmem %s0, %s372
      $region40: #{tpu_custom_call.1} parent=35 // pred_fallthru
        _
      // Predicated region
      $region41: #{tpu_custom_call.1} parent=35 // pred_check
        %p374 = pneg %p80
      $region42: #{tpu_custom_call.1} parent=35 // pred_check_branch
        %376 = sbr.rel (%p374) target = $region44
      $region43: #{tpu_custom_call.1} parent=35 // pred_region
        %p377 = scmp.lt.s32.totalorder %s25, 1
        %s378 = scalar_select %p377, %s25, 1
        %p379 = scmp.lt.s32.totalorder %s26, 3
        %s380 = scalar_select %p379, %s26, 3
        %s381 = smul.addr %s378, 4
        %s382 = sadd.s32 %s380, %s381
        %s383 = smul.addr %s382, 8
        %s384 = scalar_lea.vmem %s1, %s383
      $region44: #{tpu_custom_call.1} parent=35 // pred_fallthru
        _
      // Predicated region
      $region45: #{tpu_custom_call.1} parent=35 // pred_check
        %p385 = pneg %p108
      $region46: #{tpu_custom_call.1} parent=35 // pred_check_branch
        %387 = sbr.rel (%p385) target = $region48
      $region47: #{tpu_custom_call.1} parent=35 // pred_region
        %p388 = scmp.lt.s32.totalorder %s25, 1
        %s389 = scalar_select %p388, %s25, 1
        %p390 = scmp.lt.s32.totalorder %s26, 3
        %s391 = scalar_select %p390, %s26, 3
        %s392 = smul.addr %s389, 4
        %s393 = sadd.s32 %s391, %s392
        %s394 = smul.addr %s393, 8
        %s395 = scalar_lea.vmem %s2, %s394
      $region48: #{tpu_custom_call.1} parent=35 // pred_fallthru
        _
      // Predicated region
      $region49: #{tpu_custom_call.1} parent=35 // pred_check
        %p396 = pneg %p136
      $region50: #{tpu_custom_call.1} parent=35 // pred_check_branch
        %398 = sbr.rel (%p396) target = $region52
      $region51: #{tpu_custom_call.1} parent=35 // pred_region
        %p399 = scmp.lt.s32.totalorder %s25, 1
        %s400 = scalar_select %p399, %s25, 1
        %p401 = scmp.lt.s32.totalorder %s26, 3
        %s402 = scalar_select %p401, %s26, 3
        %s403 = smul.addr %s400, 4
        %s404 = sadd.s32 %s402, %s403
        %s405 = smul.addr %s404, 8
        %s406 = scalar_lea.vmem %s3, %s405
      $region52: #{tpu_custom_call.1} parent=35 // pred_fallthru
        _
      // Predicated region
      $region53: #{tpu_custom_call.1} parent=35 // pred_check
        %p407 = pneg %p162
      $region54: #{tpu_custom_call.1} parent=35 // pred_check_branch
        %409 = sbr.rel (%p407) target = $region56
      $region55: #{tpu_custom_call.1} parent=35 // pred_region
        %p410 = scmp.lt.s32.totalorder %s25, 1
        %s411 = scalar_select %p410, %s25, 1
        %s412 = scalar_lea.vmem %s4, %s411
      $region56: #{tpu_custom_call.1} parent=35 // pred_fallthru
        _
    $region36: #{tpu_custom_call.1} parent=5 // pred_fallthru
      _
    %p413 = scmp.le.s32.totalorder 1, %s18
    %p414 = scmp.lt.s32.totalorder %s18, 9
    %p415 = pnand %p413, %p414
    %p416 = pneg %p415
    // Predicated region
    $region57: #{tpu_custom_call.1} parent=5 // pred_check
      _
    $region58: #{tpu_custom_call.1} parent=5 // pred_check_branch
      %418 = sbr.rel (%p415) target = $region60
    $region59: #{tpu_custom_call.1} parent=5 // pred_region
      %s419 = ssub.s32 %s18, 1
      %p420 = scmp.lt.s32.totalorder %s27, 1
      %s421 = scalar_select %p420, %s27, 1
      %p422 = scmp.lt.s32.totalorder %s28, 3
      %s423 = scalar_select %p422, %s28, 3
      %s424 = smul.addr %s421, 4
      %s425 = sadd.s32 %s423, %s424
      %s426 = smul.addr %s425, 8
      %s427 = scalar_lea.vmem %s0, %s426
      %p428 = pneg %p58
      %p429 = pneg %p55
      %p430 = scmp.lt.s32.totalorder %s27, 1
      %s431 = scalar_select %p430, %s27, 1
      %p432 = scmp.lt.s32.totalorder %s28, 3
      %s433 = scalar_select %p432, %s28, 3
      %s434 = smul.addr %s431, 4
      %s435 = sadd.s32 %s433, %s434
      %s436 = smul.addr %s435, 8
      %s437 = scalar_lea.vmem %s1, %s436
      %p438 = pneg %p86
      %p439 = pneg %p83
      %p440 = scmp.lt.s32.totalorder %s27, 1
      %s441 = scalar_select %p440, %s27, 1
      %p442 = scmp.lt.s32.totalorder %s28, 3
      %s443 = scalar_select %p442, %s28, 3
      %s444 = smul.addr %s441, 4
      %s445 = sadd.s32 %s443, %s444
      %s446 = smul.addr %s445, 8
      %s447 = scalar_lea.vmem %s2, %s446
      %p448 = pneg %p114
      %p449 = pneg %p111
      %p450 = scmp.lt.s32.totalorder %s27, 1
      %s451 = scalar_select %p450, %s27, 1
      %p452 = scmp.lt.s32.totalorder %s28, 3
      %s453 = scalar_select %p452, %s28, 3
      %s454 = smul.addr %s451, 4
      %s455 = sadd.s32 %s453, %s454
      %s456 = smul.addr %s455, 8
      %s457 = scalar_lea.vmem %s3, %s456
      %p458 = pneg %p142
      %p459 = pneg %p139
      %p460 = scmp.lt.s32.totalorder %s27, 1
      %s461 = scalar_select %p460, %s27, 1
      %s462 = scalar_lea.vmem %s4, %s461
      %p463 = pneg %p168
      %p464 = pneg %p165
      %p465 = pneg %p189
      %p466 = pneg %p186
      %p467 = pneg %p210
      %p468 = pneg %p207
      %p469 = pneg %p231
      %p470 = pneg %p228
      %p471 = pneg %p252
      %p472 = pneg %p249
      %p473 = pneg %p273
      %p474 = pneg %p270
      %p475 = pneg %p301
      %p476 = pneg %p298
      %p477 = scmp.lt.s32.totalorder %s27, 1
      %s478 = scalar_select %p477, %s27, 1
      %p479 = scmp.lt.s32.totalorder %s28, 3
      %s480 = scalar_select %p479, %s28, 3
      %s481 = smul.addr %s478, 4
      %s482 = sadd.s32 %s480, %s481
      %s483 = smul.addr %s482, 8
      %s484 = scalar_lea.vmem %s10, %s483
      %p485 = pneg %p329
      %p486 = pneg %p326
      %p487 = scmp.lt.s32.totalorder %s27, 1
      %s488 = scalar_select %p487, %s27, 1
      %p489 = scmp.lt.s32.totalorder %s28, 3
      %s490 = scalar_select %p489, %s28, 3
      %s491 = smul.addr %s488, 4
      %s492 = sadd.s32 %s490, %s491
      %s493 = smul.addr %s492, 8
      %s494 = scalar_lea.vmem %s11, %s493
      %p495 = scmp.lt.s32.totalorder %s27, 1
      %s496 = scalar_select %p495, %s27, 1
      %p497 = scmp.lt.s32.totalorder %s28, 3
      %s498 = scalar_select %p497, %s28, 3
      %s499 = smul.addr %s496, 4
      %s500 = sadd.s32 %s498, %s499
      %s501 = smul.addr %s500, 8
      %s502 = scalar_lea.vmem %s0, %s501
      %p503 = scmp.lt.s32.totalorder %s27, 1
      %s504 = scalar_select %p503, %s27, 1
      %p505 = scmp.lt.s32.totalorder %s28, 3
      %s506 = scalar_select %p505, %s28, 3
      %s507 = smul.addr %s504, 4
      %s508 = sadd.s32 %s506, %s507
      %s509 = smul.addr %s508, 8
      %s510 = scalar_lea.vmem %s1, %s509
      %p511 = scmp.lt.s32.totalorder %s27, 1
      %s512 = scalar_select %p511, %s27, 1
      %p513 = scmp.lt.s32.totalorder %s28, 3
      %s514 = scalar_select %p513, %s28, 3
      %s515 = smul.addr %s512, 4
      %s516 = sadd.s32 %s514, %s515
      %s517 = smul.addr %s516, 8
      %s518 = scalar_lea.vmem %s2, %s517
      %p519 = scmp.lt.s32.totalorder %s27, 1
      %s520 = scalar_select %p519, %s27, 1
      %p521 = scmp.lt.s32.totalorder %s28, 3
      %s522 = scalar_select %p521, %s28, 3
      %s523 = smul.addr %s520, 4
      %s524 = sadd.s32 %s522, %s523
      %s525 = smul.addr %s524, 8
      %s526 = scalar_lea.vmem %s3, %s525
      %p527 = scmp.lt.s32.totalorder %s27, 1
      %s528 = scalar_select %p527, %s27, 1
      %s529 = scalar_lea.vmem %s4, %s528
      %p530 = scmp.lt.s32.totalorder %s27, 1
      %s531 = scalar_select %p530, %s27, 1
      %p532 = scmp.lt.s32.totalorder %s28, 3
      %s533 = scalar_select %p532, %s28, 3
      %s534 = smul.addr %s531, 4
      %s535 = sadd.s32 %s533, %s534
      %s536 = smul.addr %s535, 8
      %s537 = scalar_lea.vmem %s10, %s536
      %p538 = scmp.lt.s32.totalorder %s27, 1
      %s539 = scalar_select %p538, %s27, 1
      %p540 = scmp.lt.s32.totalorder %s28, 3
      %s541 = scalar_select %p540, %s28, 3
      %s542 = smul.addr %s539, 4
      %s543 = sadd.s32 %s541, %s542
      %s544 = smul.addr %s543, 8
      %s545 = scalar_lea.vmem %s11, %s544
      %v547 = vld [vmem:[%s502] sm:$0xff]
      %v548 = vld [vmem:[%s529] sm:$0x1]
      %v550 = vlaneseq
      %v551 = vshrl.u32 %v550, 7
      %v552 = vsub.s32 0, %v551
      %v553 = vrot.slane %v548, %v552
      %v555 = vadd.f32 %v547, %v553
      %v556 = vld [vmem:[%s510] sm:$0xff]
      %v557 = vld [vmem:[%s518] sm:$0xff]
      %v558 = vlaneseq
      %v559 = vshrl.u32 %v558, 7
      %vm560 = vcmp.lt.s32.totalorder %v559, 2
      %v561 = vrot.slane %v555, 6
      %v562 = vsel %vm560, 1, 0
      %vm563 = vcmp.eq.s32.totalorder %v562, 1
      %v564 = vsel %vm563, %v556, %v561
      %vm565 = vcmp.ge.s32.totalorder %v559, 6
      %v566 = vrot.slane %v555, 2
      %v567 = vsel %vm565, 1, 0
      %vm568 = vcmp.eq.s32.totalorder %v567, 1
      %v569 = vsel %vm568, %v557, %v566
      %v570 = vpack.c.bf16 %v564, %v564
      %v571 = vpack.c.bf16 %v555, %v555
      %v572 = vpack.c.bf16 %v569, %v569
      %v573 = vld [vmem:[%s526] sm:$0xff]
      %v574 = vpack.c.bf16 %v573, %v573
      %v575 = vld [vmem:[%s5] sm:$0x3]
      %v576 = vld [vmem:[%s5 + $0x2] sm:$0x3]
      %v577 = vld [vmem:[%s5 + $0x4] sm:$0x3]
      %v578 = vld [vmem:[%s5 + $0x6] sm:$0x3]
      %v579 = vld [vmem:[%s5 + $0x8] sm:$0x3]
      %v580 = vld [vmem:[%s5 + $0xa] sm:$0x3]
      %v581 = vld [vmem:[%s6] sm:$0xf]
      %v582 = vld [vmem:[%s6 + $0x4] sm:$0xf]
      %v583 = vld [vmem:[%s7] sm:$0x1]
      %v584 = vld [vmem:[%s7 + $0x1] sm:$0x1]
      %v585 = vld [vmem:[%s8] sm:$0x3]
      %v586 = vld [vmem:[%s8 + $0x2] sm:$0x3]
      %v587 = vld [vmem:[%s9] sm:$0x1]
      %v588 = vld [vmem:[%s9 + $0x1] sm:$0x1]
      %vm589 = vcmask 31744
      %v591 = vsel %vm589, %v571, 0
      %vm593 = vcmask 1041408
      %v595 = vsel %vm593, %v576, 0
      %597 = vmatprep.subr.bf16.mxu0 0
      %598 = vmatpush1.bf16.msra.mxu0 %v595
      %599 = vmatprep.subr.bf16.mxu0 0
      %600 = vmatpush1.bf16.msra.mxu0 0
      %601 = vmatprep.subr.bf16.mxu0 0
      %602 = vmatpush1.bf16.msra.mxu0 0
      %603 = vmatprep.subr.bf16.mxu0 0
      %604 = vmatpush1.bf16.msra.mxu0 0
      %605 = vmatprep.subr.bf16.mxu0 0
      %606 = vmatpush1.bf16.msra.mxu0 0
      %607 = vmatprep.subr.bf16.mxu0 0
      %608 = vmatpush1.bf16.msra.mxu0 0
      %609 = vmatprep.subr.bf16.mxu0 0
      %610 = vmatpush1.bf16.msra.mxu0 0
      %611 = vmatprep.subr.bf16.mxu0 0
      %612 = vmatpush1.bf16.msra.mxu0 0
      %613 = vmatprep.subr.bf16.mxu0 0
      %614 = vmatpush1.bf16.msra.mxu0 0
      %615 = vmatprep.subr.bf16.mxu0 0
      %616 = vmatpush1.bf16.msra.mxu0 0
      %617 = vmatprep.subr.bf16.mxu0 0
      %618 = vmatpush1.bf16.msra.mxu0 0
      %619 = vmatprep.subr.bf16.mxu0 0
      %620 = vmatpush1.bf16.msra.mxu0 0
      %621 = vmatprep.subr.bf16.mxu0 0
      %622 = vmatpush1.bf16.msra.mxu0 0
      %623 = vmatprep.subr.bf16.mxu0 0
      %624 = vmatpush1.bf16.msra.mxu0 0
      %625 = vmatprep.subr.bf16.mxu0 0
      %626 = vmatpush1.bf16.msra.mxu0 0
      %627 = vmatprep.subr.bf16.mxu0 0
      %628 = vmatpush1.bf16.msra.mxu0 0
      %629 = vmatprep.mubr.bf16.mxu0 0
      %630 = vmatmul.mubr.bf16.gmra.mrb[0].mxu0 %v591
      %v631 = vpop.f32.mrb[0].mxu0
      %v632 = vadd.f32 0.0, %v631
      %v633 = vpop.f32.mrb[0].mxu0
      %v634 = vpop.f32.mrb[0].mxu0
      %v635 = vpop.f32.mrb[0].mxu0
      %636 = vdwg.mxu0
      %v638 = vsel %vm589, %v570, 0
      %v641 = vsel %vm593, %v575, 0
      %643 = vmatprep.subr.bf16.mxu0 0
      %644 = vmatpush1.bf16.msra.mxu0 %v641
      %645 = vmatprep.subr.bf16.mxu0 0
      %646 = vmatpush1.bf16.msra.mxu0 0
      %647 = vmatprep.subr.bf16.mxu0 0
      %648 = vmatpush1.bf16.msra.mxu0 0
      %649 = vmatprep.subr.bf16.mxu0 0
      %650 = vmatpush1.bf16.msra.mxu0 0
      %651 = vmatprep.subr.bf16.mxu0 0
      %652 = vmatpush1.bf16.msra.mxu0 0
      %653 = vmatprep.subr.bf16.mxu0 0
      %654 = vmatpush1.bf16.msra.mxu0 0
      %655 = vmatprep.subr.bf16.mxu0 0
      %656 = vmatpush1.bf16.msra.mxu0 0
      %657 = vmatprep.subr.bf16.mxu0 0
      %658 = vmatpush1.bf16.msra.mxu0 0
      %659 = vmatprep.subr.bf16.mxu0 0
      %660 = vmatpush1.bf16.msra.mxu0 0
      %661 = vmatprep.subr.bf16.mxu0 0
      %662 = vmatpush1.bf16.msra.mxu0 0
      %663 = vmatprep.subr.bf16.mxu0 0
      %664 = vmatpush1.bf16.msra.mxu0 0
      %665 = vmatprep.subr.bf16.mxu0 0
      %666 = vmatpush1.bf16.msra.mxu0 0
      %667 = vmatprep.subr.bf16.mxu0 0
      %668 = vmatpush1.bf16.msra.mxu0 0
      %669 = vmatprep.subr.bf16.mxu0 0
      %670 = vmatpush1.bf16.msra.mxu0 0
      %671 = vmatprep.subr.bf16.mxu0 0
      %672 = vmatpush1.bf16.msra.mxu0 0
      %673 = vmatprep.subr.bf16.mxu0 0
      %674 = vmatpush1.bf16.msra.mxu0 0
      %675 = vmatprep.mubr.bf16.mxu0 0
      %676 = vmatmul.mubr.bf16.gmra.mrb[0].mxu0 %v638
      %v677 = vpop.f32.mrb[0].mxu0
      %v678 = vadd.f32 %v632, %v677
      %v679 = vpop.f32.mrb[0].mxu0
      %v680 = vpop.f32.mrb[0].mxu0
      %v681 = vpop.f32.mrb[0].mxu0
      %682 = vdwg.mxu0
      %v684 = vsel %vm589, %v572, 0
      %v687 = vsel %vm593, %v577, 0
      %689 = vmatprep.subr.bf16.mxu0 0
      %690 = vmatpush1.bf16.msra.mxu0 %v687
      %691 = vmatprep.subr.bf16.mxu0 0
      %692 = vmatpush1.bf16.msra.mxu0 0
      %693 = vmatprep.subr.bf16.mxu0 0
      %694 = vmatpush1.bf16.msra.mxu0 0
      %695 = vmatprep.subr.bf16.mxu0 0
      %696 = vmatpush1.bf16.msra.mxu0 0
      %697 = vmatprep.subr.bf16.mxu0 0
      %698 = vmatpush1.bf16.msra.mxu0 0
      %699 = vmatprep.subr.bf16.mxu0 0
      %700 = vmatpush1.bf16.msra.mxu0 0
      %701 = vmatprep.subr.bf16.mxu0 0
      %702 = vmatpush1.bf16.msra.mxu0 0
      %703 = vmatprep.subr.bf16.mxu0 0
      %704 = vmatpush1.bf16.msra.mxu0 0
      %705 = vmatprep.subr.bf16.mxu0 0
      %706 = vmatpush1.bf16.msra.mxu0 0
      %707 = vmatprep.subr.bf16.mxu0 0
      %708 = vmatpush1.bf16.msra.mxu0 0
      %709 = vmatprep.subr.bf16.mxu0 0
      %710 = vmatpush1.bf16.msra.mxu0 0
      %711 = vmatprep.subr.bf16.mxu0 0
      %712 = vmatpush1.bf16.msra.mxu0 0
      %713 = vmatprep.subr.bf16.mxu0 0
      %714 = vmatpush1.bf16.msra.mxu0 0
      %715 = vmatprep.subr.bf16.mxu0 0
      %716 = vmatpush1.bf16.msra.mxu0 0
      %717 = vmatprep.subr.bf16.mxu0 0
      %718 = vmatpush1.bf16.msra.mxu0 0
      %719 = vmatprep.subr.bf16.mxu0 0
      %720 = vmatpush1.bf16.msra.mxu0 0
      %721 = vmatprep.mubr.bf16.mxu0 0
      %722 = vmatmul.mubr.bf16.gmra.mrb[0].mxu0 %v684
      %v723 = vpop.f32.mrb[0].mxu0
      %v724 = vadd.f32 0.0, %v723
      %v725 = vpop.f32.mrb[0].mxu0
      %v726 = vpop.f32.mrb[0].mxu0
      %v727 = vpop.f32.mrb[0].mxu0
      %728 = vdwg.mxu0
      %v729 = vadd.f32 %v678, %v724
      %vm730 = vcmask 64512
      %v732 = vsel %vm730, %v574, 0
      %vm734 = vcmask 1043456
      %v736 = vsel %vm734, %v581, 0
      %738 = vmatprep.subr.bf16.mxu0 0
      %739 = vmatpush1.bf16.msra.mxu0 %v736
      %740 = vmatprep.subr.bf16.mxu0 0
      %741 = vmatpush1.bf16.msra.mxu0 0
      %742 = vmatprep.subr.bf16.mxu0 0
      %743 = vmatpush1.bf16.msra.mxu0 0
      %744 = vmatprep.subr.bf16.mxu0 0
      %745 = vmatpush1.bf16.msra.mxu0 0
      %746 = vmatprep.subr.bf16.mxu0 0
      %747 = vmatpush1.bf16.msra.mxu0 0
      %748 = vmatprep.subr.bf16.mxu0 0
      %749 = vmatpush1.bf16.msra.mxu0 0
      %750 = vmatprep.subr.bf16.mxu0 0
      %751 = vmatpush1.bf16.msra.mxu0 0
      %752 = vmatprep.subr.bf16.mxu0 0
      %753 = vmatpush1.bf16.msra.mxu0 0
      %754 = vmatprep.subr.bf16.mxu0 0
      %755 = vmatpush1.bf16.msra.mxu0 0
      %756 = vmatprep.subr.bf16.mxu0 0
      %757 = vmatpush1.bf16.msra.mxu0 0
      %758 = vmatprep.subr.bf16.mxu0 0
      %759 = vmatpush1.bf16.msra.mxu0 0
      %760 = vmatprep.subr.bf16.mxu0 0
      %761 = vmatpush1.bf16.msra.mxu0 0
      %762 = vmatprep.subr.bf16.mxu0 0
      %763 = vmatpush1.bf16.msra.mxu0 0
      %764 = vmatprep.subr.bf16.mxu0 0
      %765 = vmatpush1.bf16.msra.mxu0 0
      %766 = vmatprep.subr.bf16.mxu0 0
      %767 = vmatpush1.bf16.msra.mxu0 0
      %768 = vmatprep.subr.bf16.mxu0 0
      %769 = vmatpush1.bf16.msra.mxu0 0
      %770 = vmatprep.mubr.bf16.mxu0 0
      %771 = vmatmul.mubr.bf16.gmra.mrb[0].mxu0 %v732
      %v772 = vpop.f32.mrb[0].mxu0
      %v773 = vadd.f32 0.0, %v772
      %v774 = vpop.f32.mrb[0].mxu0
      %v775 = vpop.f32.mrb[0].mxu0
      %v776 = vpop.f32.mrb[0].mxu0
      %777 = vdwg.mxu0
      %v778 = vadd.f32 %v729, %v773
      %v780 = vlaneseq
      %v781 = vshrl.u32 %v780, 7
      %v782 = vsub.s32 0, %v781
      %v783 = vrot.slane %v583, %v782
      %v785 = vadd.f32 %v778, %v783
      %v787 = vsel %vm593, %v579, 0
      %789 = vmatprep.subr.bf16.mxu0 0
      %790 = vmatpush1.bf16.msra.mxu0 %v787
      %791 = vmatprep.subr.bf16.mxu0 0
      %792 = vmatpush1.bf16.msra.mxu0 0
      %793 = vmatprep.subr.bf16.mxu0 0
      %794 = vmatpush1.bf16.msra.mxu0 0
      %795 = vmatprep.subr.bf16.mxu0 0
      %796 = vmatpush1.bf16.msra.mxu0 0
      %797 = vmatprep.subr.bf16.mxu0 0
      %798 = vmatpush1.bf16.msra.mxu0 0
      %799 = vmatprep.subr.bf16.mxu0 0
      %800 = vmatpush1.bf16.msra.mxu0 0
      %801 = vmatprep.subr.bf16.mxu0 0
      %802 = vmatpush1.bf16.msra.mxu0 0
      %803 = vmatprep.subr.bf16.mxu0 0
      %804 = vmatpush1.bf16.msra.mxu0 0
      %805 = vmatprep.subr.bf16.mxu0 0
      %806 = vmatpush1.bf16.msra.mxu0 0
      %807 = vmatprep.subr.bf16.mxu0 0
      %808 = vmatpush1.bf16.msra.mxu0 0
      %809 = vmatprep.subr.bf16.mxu0 0
      %810 = vmatpush1.bf16.msra.mxu0 0
      %811 = vmatprep.subr.bf16.mxu0 0
      %812 = vmatpush1.bf16.msra.mxu0 0
      %813 = vmatprep.subr.bf16.mxu0 0
      %814 = vmatpush1.bf16.msra.mxu0 0
      %815 = vmatprep.subr.bf16.mxu0 0
      %816 = vmatpush1.bf16.msra.mxu0 0
      %817 = vmatprep.subr.bf16.mxu0 0
      %818 = vmatpush1.bf16.msra.mxu0 0
      %819 = vmatprep.subr.bf16.mxu0 0
      %820 = vmatpush1.bf16.msra.mxu0 0
      %821 = vmatprep.mubr.bf16.mxu0 0
      %822 = vmatmul.mubr.bf16.gmra.mrb[0].mxu0 %v591
      %v823 = vpop.f32.mrb[0].mxu0
      %v824 = vadd.f32 0.0, %v823
      %v825 = vpop.f32.mrb[0].mxu0
      %v826 = vpop.f32.mrb[0].mxu0
      %v827 = vpop.f32.mrb[0].mxu0
      %828 = vdwg.mxu0
      %v830 = vsel %vm593, %v578, 0
      %832 = vmatprep.subr.bf16.mxu0 0
      %833 = vmatpush1.bf16.msra.mxu0 %v830
      %834 = vmatprep.subr.bf16.mxu0 0
      %835 = vmatpush1.bf16.msra.mxu0 0
      %836 = vmatprep.subr.bf16.mxu0 0
      %837 = vmatpush1.bf16.msra.mxu0 0
      %838 = vmatprep.subr.bf16.mxu0 0
      %839 = vmatpush1.bf16.msra.mxu0 0
      %840 = vmatprep.subr.bf16.mxu0 0
      %841 = vmatpush1.bf16.msra.mxu0 0
      %842 = vmatprep.subr.bf16.mxu0 0
      %843 = vmatpush1.bf16.msra.mxu0 0
      %844 = vmatprep.subr.bf16.mxu0 0
      %845 = vmatpush1.bf16.msra.mxu0 0
      %846 = vmatprep.subr.bf16.mxu0 0
      %847 = vmatpush1.bf16.msra.mxu0 0
      %848 = vmatprep.subr.bf16.mxu0 0
      %849 = vmatpush1.bf16.msra.mxu0 0
      %850 = vmatprep.subr.bf16.mxu0 0
      %851 = vmatpush1.bf16.msra.mxu0 0
      %852 = vmatprep.subr.bf16.mxu0 0
      %853 = vmatpush1.bf16.msra.mxu0 0
      %854 = vmatprep.subr.bf16.mxu0 0
      %855 = vmatpush1.bf16.msra.mxu0 0
      %856 = vmatprep.subr.bf16.mxu0 0
      %857 = vmatpush1.bf16.msra.mxu0 0
      %858 = vmatprep.subr.bf16.mxu0 0
      %859 = vmatpush1.bf16.msra.mxu0 0
      %860 = vmatprep.subr.bf16.mxu0 0
      %861 = vmatpush1.bf16.msra.mxu0 0
      %862 = vmatprep.subr.bf16.mxu0 0
      %863 = vmatpush1.bf16.msra.mxu0 0
      %864 = vmatprep.mubr.bf16.mxu0 0
      %865 = vmatmul.mubr.bf16.gmra.mrb[0].mxu0 %v638
      %v866 = vpop.f32.mrb[0].mxu0
      %v867 = vadd.f32 %v824, %v866
      %v868 = vpop.f32.mrb[0].mxu0
      %v869 = vpop.f32.mrb[0].mxu0
      %v870 = vpop.f32.mrb[0].mxu0
      %871 = vdwg.mxu0
      %v873 = vsel %vm593, %v580, 0
      %875 = vmatprep.subr.bf16.mxu0 0
      %876 = vmatpush1.bf16.msra.mxu0 %v873
      %877 = vmatprep.subr.bf16.mxu0 0
      %878 = vmatpush1.bf16.msra.mxu0 0
      %879 = vmatprep.subr.bf16.mxu0 0
      %880 = vmatpush1.bf16.msra.mxu0 0
      %881 = vmatprep.subr.bf16.mxu0 0
      %882 = vmatpush1.bf16.msra.mxu0 0
      %883 = vmatprep.subr.bf16.mxu0 0
      %884 = vmatpush1.bf16.msra.mxu0 0
      %885 = vmatprep.subr.bf16.mxu0 0
      %886 = vmatpush1.bf16.msra.mxu0 0
      %887 = vmatprep.subr.bf16.mxu0 0
      %888 = vmatpush1.bf16.msra.mxu0 0
      %889 = vmatprep.subr.bf16.mxu0 0
      %890 = vmatpush1.bf16.msra.mxu0 0
      %891 = vmatprep.subr.bf16.mxu0 0
      %892 = vmatpush1.bf16.msra.mxu0 0
      %893 = vmatprep.subr.bf16.mxu0 0
      %894 = vmatpush1.bf16.msra.mxu0 0
      %895 = vmatprep.subr.bf16.mxu0 0
      %896 = vmatpush1.bf16.msra.mxu0 0
      %897 = vmatprep.subr.bf16.mxu0 0
      %898 = vmatpush1.bf16.msra.mxu0 0
      %899 = vmatprep.subr.bf16.mxu0 0
      %900 = vmatpush1.bf16.msra.mxu0 0
      %901 = vmatprep.subr.bf16.mxu0 0
      %902 = vmatpush1.bf16.msra.mxu0 0
      %903 = vmatprep.subr.bf16.mxu0 0
      %904 = vmatpush1.bf16.msra.mxu0 0
      %905 = vmatprep.subr.bf16.mxu0 0
      %906 = vmatpush1.bf16.msra.mxu0 0
      %907 = vmatprep.mubr.bf16.mxu0 0
      %908 = vmatmul.mubr.bf16.gmra.mrb[0].mxu0 %v684
      %v909 = vpop.f32.mrb[0].mxu0
      %v910 = vadd.f32 0.0, %v909
      %v911 = vpop.f32.mrb[0].mxu0
      %v912 = vpop.f32.mrb[0].mxu0
      %v913 = vpop.f32.mrb[0].mxu0
      %914 = vdwg.mxu0
      %v915 = vadd.f32 %v867, %v910
      %v917 = vsel %vm734, %v582, 0
      %919 = vmatprep.subr.bf16.mxu0 0
      %920 = vmatpush1.bf16.msra.mxu0 %v917
      %921 = vmatprep.subr.bf16.mxu0 0
      %922 = vmatpush1.bf16.msra.mxu0 0
      %923 = vmatprep.subr.bf16.mxu0 0
      %924 = vmatpush1.bf16.msra.mxu0 0
      %925 = vmatprep.subr.bf16.mxu0 0
      %926 = vmatpush1.bf16.msra.mxu0 0
      %927 = vmatprep.subr.bf16.mxu0 0
      %928 = vmatpush1.bf16.msra.mxu0 0
      %929 = vmatprep.subr.bf16.mxu0 0
      %930 = vmatpush1.bf16.msra.mxu0 0
      %931 = vmatprep.subr.bf16.mxu0 0
      %932 = vmatpush1.bf16.msra.mxu0 0
      %933 = vmatprep.subr.bf16.mxu0 0
      %934 = vmatpush1.bf16.msra.mxu0 0
      %935 = vmatprep.subr.bf16.mxu0 0
      %936 = vmatpush1.bf16.msra.mxu0 0
      %937 = vmatprep.subr.bf16.mxu0 0
      %938 = vmatpush1.bf16.msra.mxu0 0
      %939 = vmatprep.subr.bf16.mxu0 0
      %940 = vmatpush1.bf16.msra.mxu0 0
      %941 = vmatprep.subr.bf16.mxu0 0
      %942 = vmatpush1.bf16.msra.mxu0 0
      %943 = vmatprep.subr.bf16.mxu0 0
      %944 = vmatpush1.bf16.msra.mxu0 0
      %945 = vmatprep.subr.bf16.mxu0 0
      %946 = vmatpush1.bf16.msra.mxu0 0
      %947 = vmatprep.subr.bf16.mxu0 0
      %948 = vmatpush1.bf16.msra.mxu0 0
      %949 = vmatprep.subr.bf16.mxu0 0
      %950 = vmatpush1.bf16.msra.mxu0 0
      %951 = vmatprep.mubr.bf16.mxu0 0
      %952 = vmatmul.mubr.bf16.gmra.mrb[0].mxu0 %v732
      %v953 = vpop.f32.mrb[0].mxu0
      %v954 = vadd.f32 0.0, %v953
      %v955 = vpop.f32.mrb[0].mxu0
      %v956 = vpop.f32.mrb[0].mxu0
      %v957 = vpop.f32.mrb[0].mxu0
      %958 = vdwg.mxu0
      %v959 = vadd.f32 %v915, %v954
      %v961 = vlaneseq
      %v962 = vshrl.u32 %v961, 7
      %v963 = vsub.s32 0, %v962
      %v964 = vrot.slane %v584, %v963
      %v966 = vadd.f32 %v959, %v964
      %v967 = vxor.u32 %v785, 2147483648
      %v968 = vmul.f32 %v967, 1.442695
      %v969 = vpow.pop %v968
      %v970 = vadd.f32 %v969, 1.0
      %v971 = vrcp.pop %v970
      %v972 = vmul.f32 1.0, %v971
      %v973 = vtanh.pop %v966
      %v974 = vmul.f32 %v972, %v973
      %v975 = vpack.c.bf16 %v974, %v974
      %v977 = vlaneseq
      %v978 = vshrl.u32 %v977, 7
      %v979 = vsub.s32 0, %v978
      %v980 = vrot.slane %v587, %v979
      %v983 = vsel %vm589, %v975, 0
      %v986 = vsel %vm593, %v585, 0
      %988 = vmatprep.subr.bf16.mxu0 0
      %989 = vmatpush1.bf16.msra.mxu0 %v986
      %990 = vmatprep.subr.bf16.mxu0 0
      %991 = vmatpush1.bf16.msra.mxu0 0
      %992 = vmatprep.subr.bf16.mxu0 0
      %993 = vmatpush1.bf16.msra.mxu0 0
      %994 = vmatprep.subr.bf16.mxu0 0
      %995 = vmatpush1.bf16.msra.mxu0 0
      %996 = vmatprep.subr.bf16.mxu0 0
      %997 = vmatpush1.bf16.msra.mxu0 0
      %998 = vmatprep.subr.bf16.mxu0 0
      %999 = vmatpush1.bf16.msra.mxu0 0
      %1000 = vmatprep.subr.bf16.mxu0 0
      %1001 = vmatpush1.bf16.msra.mxu0 0
      %1002 = vmatprep.subr.bf16.mxu0 0
      %1003 = vmatpush1.bf16.msra.mxu0 0
      %1004 = vmatprep.subr.bf16.mxu0 0
      %1005 = vmatpush1.bf16.msra.mxu0 0
      %1006 = vmatprep.subr.bf16.mxu0 0
      %1007 = vmatpush1.bf16.msra.mxu0 0
      %1008 = vmatprep.subr.bf16.mxu0 0
      %1009 = vmatpush1.bf16.msra.mxu0 0
      %1010 = vmatprep.subr.bf16.mxu0 0
      %1011 = vmatpush1.bf16.msra.mxu0 0
      %1012 = vmatprep.subr.bf16.mxu0 0
      %1013 = vmatpush1.bf16.msra.mxu0 0
      %1014 = vmatprep.subr.bf16.mxu0 0
      %1015 = vmatpush1.bf16.msra.mxu0 0
      %1016 = vmatprep.subr.bf16.mxu0 0
      %1017 = vmatpush1.bf16.msra.mxu0 0
      %1018 = vmatprep.subr.bf16.mxu0 0
      %1019 = vmatpush1.bf16.msra.mxu0 0
      %1020 = vmatprep.mubr.bf16.mxu0 0
      %1021 = vmatmul.mubr.bf16.gmra.mrb[0].mxu0 %v983
      %v1022 = vpop.f32.mrb[0].mxu0
      %v1023 = vadd.f32 %v980, %v1022
      %v1024 = vpop.f32.mrb[0].mxu0
      %v1025 = vpop.f32.mrb[0].mxu0
      %v1026 = vpop.f32.mrb[0].mxu0
      %1027 = vdwg.mxu0
      %v1029 = vlaneseq
      %v1030 = vshrl.u32 %v1029, 7
      %v1031 = vsub.s32 0, %v1030
      %v1032 = vrot.slane %v588, %v1031
      %v1035 = vsel %vm593, %v586, 0
      %1037 = vmatprep.subr.bf16.mxu0 0
      %1038 = vmatpush1.bf16.msra.mxu0 %v1035
      %1039 = vmatprep.subr.bf16.mxu0 0
      %1040 = vmatpush1.bf16.msra.mxu0 0
      %1041 = vmatprep.subr.bf16.mxu0 0
      %1042 = vmatpush1.bf16.msra.mxu0 0
      %1043 = vmatprep.subr.bf16.mxu0 0
      %1044 = vmatpush1.bf16.msra.mxu0 0
      %1045 = vmatprep.subr.bf16.mxu0 0
      %1046 = vmatpush1.bf16.msra.mxu0 0
      %1047 = vmatprep.subr.bf16.mxu0 0
      %1048 = vmatpush1.bf16.msra.mxu0 0
      %1049 = vmatprep.subr.bf16.mxu0 0
      %1050 = vmatpush1.bf16.msra.mxu0 0
      %1051 = vmatprep.subr.bf16.mxu0 0
      %1052 = vmatpush1.bf16.msra.mxu0 0
      %1053 = vmatprep.subr.bf16.mxu0 0
      %1054 = vmatpush1.bf16.msra.mxu0 0
      %1055 = vmatprep.subr.bf16.mxu0 0
      %1056 = vmatpush1.bf16.msra.mxu0 0
      %1057 = vmatprep.subr.bf16.mxu0 0
      %1058 = vmatpush1.bf16.msra.mxu0 0
      %1059 = vmatprep.subr.bf16.mxu0 0
      %1060 = vmatpush1.bf16.msra.mxu0 0
      %1061 = vmatprep.subr.bf16.mxu0 0
      %1062 = vmatpush1.bf16.msra.mxu0 0
      %1063 = vmatprep.subr.bf16.mxu0 0
      %1064 = vmatpush1.bf16.msra.mxu0 0
      %1065 = vmatprep.subr.bf16.mxu0 0
      %1066 = vmatpush1.bf16.msra.mxu0 0
      %1067 = vmatprep.subr.bf16.mxu0 0
      %1068 = vmatpush1.bf16.msra.mxu0 0
      %1069 = vmatprep.mubr.bf16.mxu0 0
      %1070 = vmatmul.mubr.bf16.gmra.mrb[0].mxu0 %v983
      %v1071 = vpop.f32.mrb[0].mxu0
      %v1072 = vadd.f32 %v1032, %v1071
      %v1073 = vpop.f32.mrb[0].mxu0
      %v1074 = vpop.f32.mrb[0].mxu0
      %v1075 = vpop.f32.mrb[0].mxu0
      %1076 = vdwg.mxu0
      %v1077 = vadd.f32 %v547, %v1023
      %v1078 = vmul.f32 %v1077, 0.70710677
      %1079 = vst.msk [vmem:[%s537] sm:$0xff] %vm589, %v1078
      %1080 = vst.msk [vmem:[%s545] sm:$0xff] %vm589, %v1072
      %p1081 = scmp.lt.s32.totalorder %s27, 1
      %s1082 = scalar_select %p1081, %s27, 1
      %p1083 = scmp.lt.s32.totalorder %s28, 3
      %s1084 = scalar_select %p1083, %s28, 3
      %s1085 = smul.addr %s1082, 4
      %s1086 = sadd.s32 %s1084, %s1085
      %s1087 = smul.addr %s1086, 8
      %s1088 = scalar_lea.vmem %s10, %s1087
      %p1089 = scmp.lt.s32.totalorder %s27, 1
      %s1090 = scalar_select %p1089, %s27, 1
      %p1091 = scmp.lt.s32.totalorder %s28, 3
      %s1092 = scalar_select %p1091, %s28, 3
      %s1093 = smul.addr %s1090, 4
      %s1094 = sadd.s32 %s1092, %s1093
      %s1095 = smul.addr %s1094, 8
      %s1096 = scalar_lea.vmem %s11, %s1095
      // Predicated region
      $region61: #{tpu_custom_call.1} parent=59 // pred_check
        %p1097 = pneg %p298
      $region62: #{tpu_custom_call.1} parent=59 // pred_check_branch
        %1099 = sbr.rel (%p1097) target = $region64
      $region63: #{tpu_custom_call.1} parent=59 // pred_region
        _
      $region64: #{tpu_custom_call.1} parent=59 // pred_fallthru
        _
      // Predicated region
      $region65: #{tpu_custom_call.1} parent=59 // pred_check
        %p1100 = pneg %p326
      $region66: #{tpu_custom_call.1} parent=59 // pred_check_branch
        %1102 = sbr.rel (%p1100) target = $region68
      $region67: #{tpu_custom_call.1} parent=59 // pred_region
        _
      $region68: #{tpu_custom_call.1} parent=59 // pred_fallthru
        _
    $region60: #{tpu_custom_call.1} parent=5 // pred_fallthru
      _
    %p1103 = scmp.le.s32.totalorder 2, %s18
    // Predicated region
    $region69: #{tpu_custom_call.1} parent=5 // pred_check
      %p1104 = pneg %p1103
    $region70: #{tpu_custom_call.1} parent=5 // pred_check_branch
      %1106 = sbr.rel (%p1104) target = $region72
    $region71: #{tpu_custom_call.1} parent=5 // pred_region
      %s1107 = ssub.s32 %s18, 2
      // Predicated region
      $region73: #{tpu_custom_call.1} parent=71 // pred_check
        %p1108 = pneg %p304
      $region74: #{tpu_custom_call.1} parent=71 // pred_check_branch
        %1110 = sbr.rel (%p1108) target = $region76
      $region75: #{tpu_custom_call.1} parent=71 // pred_region
        %p1111 = scmp.lt.s32.totalorder %s29, 1
        %s1112 = scalar_select %p1111, %s29, 1
        %p1113 = scmp.lt.s32.totalorder %s30, 3
        %s1114 = scalar_select %p1113, %s30, 3
        %s1115 = smul.addr %s1112, 4
        %s1116 = sadd.s32 %s1114, %s1115
        %s1117 = smul.addr %s1116, 8
        %s1118 = scalar_lea.vmem %s10, %s1117
      $region76: #{tpu_custom_call.1} parent=71 // pred_fallthru
        _
      // Predicated region
      $region77: #{tpu_custom_call.1} parent=71 // pred_check
        %p1119 = pneg %p332
      $region78: #{tpu_custom_call.1} parent=71 // pred_check_branch
        %1121 = sbr.rel (%p1119) target = $region80
      $region79: #{tpu_custom_call.1} parent=71 // pred_region
        %p1122 = scmp.lt.s32.totalorder %s29, 1
        %s1123 = scalar_select %p1122, %s29, 1
        %p1124 = scmp.lt.s32.totalorder %s30, 3
        %s1125 = scalar_select %p1124, %s30, 3
        %s1126 = smul.addr %s1123, 4
        %s1127 = sadd.s32 %s1125, %s1126
        %s1128 = smul.addr %s1127, 8
        %s1129 = scalar_lea.vmem %s11, %s1128
      $region80: #{tpu_custom_call.1} parent=71 // pred_fallthru
        _
    $region72: #{tpu_custom_call.1} parent=5 // pred_fallthru
      _
  $region6: #{tpu_custom_call.1} parent=0 // loop_footer
    %s22 = sadd.s32 1, %s18
  $region7: #{tpu_custom_call.1} parent=0 // loop_footer_branch
    %17 = sbr.rel target = $region3
  $region8: #{tpu_custom_call.1} parent=0 // loop_exit
    _

</llo_original>
